<compile_context>
chip_gen: v7x
topology: tpu7x:2x2x1
jax: 0.10.0
libtpu: 0.0.40
codegen_flags: <defaults>
</compile_context>

<pallas_src>
import functools

import jax
import jax.numpy as jnp
from jax.experimental import pallas as pl

EPS = 0.1


# ---------------------------------------------------------------------------
# In-kernel math helpers (f32 elementwise, EUP-friendly sigmoid / rsqrt).
# ---------------------------------------------------------------------------
def _sigmoid_kernel(v):
    # 1 / (1 + exp(-v)) with the reciprocal on the EUP (approx=True).
    return pl.reciprocal(1.0 + jnp.exp(-v), approx=True)


def _swish_kernel(v):
    return v * _sigmoid_kernel(v)


def _layernorm(v, gamma, beta, eps):
    mu = jnp.mean(v, axis=-1, keepdims=True)
    c = v - mu                                   # computed once, reused
    var = jnp.mean(c * c, axis=-1, keepdims=True)
    return c * jax.lax.rsqrt(var + eps) * gamma + beta


# ---------------------------------------------------------------------------
# Kernel: whole problem (all instances, flattened) in one invocation.
# ---------------------------------------------------------------------------
def decoder_kernel(
    x_ref,
    w1_ref, b1_ref, g1_ref, be1_ref,
    w2_ref, b2_ref, g2_ref, be2_ref,
    w3_ref, b3_ref, g3_ref, be3_ref,
    w4_ref, b4_ref, g4_ref, be4_ref,
    w5_ref, b5_ref, g5_ref, be5_ref,
    wr_ref, br_ref,
    wl_ref, bl_ref,
    out_ref,
    *, eps, num_instances, batch,
):
    def linear(h, w_ref, b_ref):
        # bf16 operands on the MXU, f32 accumulation, f32 bias add.
        return (
            jnp.dot(h.astype(jnp.bfloat16), w_ref[...],
                    preferred_element_type=jnp.float32)
            + b_ref[...]
        )

    x = x_ref[...].astype(jnp.float32)           # [G*B, latent_dim]

    h1 = _layernorm(_swish_kernel(linear(x, w1_ref, b1_ref)),
                    g1_ref[...], be1_ref[...], eps)
    res = h1                                     # running residual accumulator
    h2 = _layernorm(_swish_kernel(linear(h1, w2_ref, b2_ref) + res),
                    g2_ref[...], be2_ref[...], eps)
    res = res + h2
    h3 = _layernorm(_swish_kernel(linear(h2, w3_ref, b3_ref) + res),
                    g3_ref[...], be3_ref[...], eps)
    res = res + h3
    h4 = _layernorm(_swish_kernel(linear(h3, w4_ref, b4_ref) + res),
                    g4_ref[...], be4_ref[...], eps)
    res = res + h4
    h5 = _layernorm(_swish_kernel(linear(h4, w5_ref, b5_ref) + res),
                    g5_ref[...], be5_ref[...], eps)

    # [G*B, input_dim] each, pre-cast once for the final per-instance matmuls.
    output = _sigmoid_kernel(linear(h5, wr_ref, br_ref)).astype(jnp.bfloat16)
    latent = _sigmoid_kernel(linear(x, wl_ref, bl_ref)).astype(jnp.bfloat16)

    # Per-instance: sigmoid(output) @ sigmoid(latent)  (valid: input_dim == batch).
    for g in range(num_instances):               # tiny static unroll (G = 4)
        lo = g * batch
        out_ref[g] = jnp.dot(output[lo:lo + batch, :],
                             latent[lo:lo + batch, :],
                             preferred_element_type=jnp.float32)


# ---------------------------------------------------------------------------
# Wrapper: single pallas_call, whole-array (VMEM-resident) operands.
# ---------------------------------------------------------------------------
def decoder_forward(x, params):
    """x: [num_instances, batch, latent_dim] -> [num_instances, batch, input_dim]."""
    G, B, L = x.shape
    H = params["w1"].shape[1]
    I = params["wr"].shape[1]

    # Cast weight matrices (matmul operands) to bf16 once on the host.
    def w(name):
        return params[name].astype(jnp.bfloat16)

    args = (
        x.reshape(G * B, L),                     # flatten instances for the MXU
        w("w1"), params["b1"], params["g1"], params["be1"],
        w("w2"), params["b2"], params["g2"], params["be2"],
        w("w3"), params["b3"], params["g3"], params["be3"],
        w("w4"), params["b4"], params["g4"], params["be4"],
        w("w5"), params["b5"], params["g5"], params["be5"],
        w("wr"), params["br"],
        w("wl"), params["bl"],
    )

    # Advisory cost estimate for the XLA scheduler.
    rows = G * B
    flops = 2 * (rows * L * H + 4 * rows * H * H + rows * H * I + rows * L * I
                 + G * B * I * I)
    trans = 2 * 5 * rows * H + 2 * 2 * rows * I + 5 * rows
    param_bytes = sum(int(a.size) * a.dtype.itemsize for a in args[1:])
    cost = pl.CostEstimate(
        flops=flops,
        transcendentals=trans,
        bytes_accessed=int(args[0].nbytes) + G * B * I * 4 + param_bytes,
    )

    return pl.pallas_call(
        functools.partial(decoder_kernel, eps=EPS, num_instances=G, batch=B),
        out_shape=jax.ShapeDtypeStruct((G, B, I), jnp.float32),
        cost_estimate=cost,
    )(*args)


# ---------------------------------------------------------------------------
# Deterministic synthetic init (PyTorch-Linear-style uniform).
# ---------------------------------------------------------------------------
def init_params(key, latent_dim, hidden_dim, input_dim):
    def linear_init(k, fan_in, fan_out):
        k1, k2 = jax.random.split(k)
        bound = 1.0 / jnp.sqrt(float(fan_in))
        w = jax.random.uniform(k1, (fan_in, fan_out), jnp.float32, -bound, bound)
        b = jax.random.uniform(k2, (1, fan_out), jnp.float32, -bound, bound)
        return w, b

    keys = jax.random.split(key, 7)
    p = {}
    p["w1"], p["b1"] = linear_init(keys[0], latent_dim, hidden_dim)
    p["w2"], p["b2"] = linear_init(keys[1], hidden_dim, hidden_dim)
    p["w3"], p["b3"] = linear_init(keys[2], hidden_dim, hidden_dim)
    p["w4"], p["b4"] = linear_init(keys[3], hidden_dim, hidden_dim)
    p["w5"], p["b5"] = linear_init(keys[4], hidden_dim, hidden_dim)
    p["wr"], p["br"] = linear_init(keys[5], hidden_dim, input_dim)
    p["wl"], p["bl"] = linear_init(keys[6], latent_dim, input_dim)
    for i in range(1, 6):
        p[f"g{i}"] = jnp.ones((1, hidden_dim), jnp.float32)
        p[f"be{i}"] = jnp.zeros((1, hidden_dim), jnp.float32)
    return p


# ---------------------------------------------------------------------------
# Pure-JAX reference (mirrors the kernel's bf16 matmul operands so the
# comparison isolates kernel correctness rather than bf16 rounding).
# ---------------------------------------------------------------------------
def decoder_forward_ref(x, params):
    def lin(h, w_, b_):
        return (jnp.dot(h.astype(jnp.bfloat16), w_.astype(jnp.bfloat16),
                        preferred_element_type=jnp.float32) + b_)

    def ln(v, gamma, beta):
        mu = jnp.mean(v, axis=-1, keepdims=True)
        var = jnp.mean((v - mu) ** 2, axis=-1, keepdims=True)
        return (v - mu) * jax.lax.rsqrt(var + EPS) * gamma + beta

    def sw(v):
        return v * jax.nn.sigmoid(v)

    def one(xi):
        h1 = ln(sw(lin(xi, params["w1"], params["b1"])), params["g1"], params["be1"])
        h2 = ln(sw(lin(h1, params["w2"], params["b2"]) + h1),
                params["g2"], params["be2"])
        h3 = ln(sw(lin(h2, params["w3"], params["b3"]) + h1 + h2),
                params["g3"], params["be3"])
        h4 = ln(sw(lin(h3, params["w4"], params["b4"]) + h1 + h2 + h3),
                params["g4"], params["be4"])
        h5 = ln(sw(lin(h4, params["w5"], params["b5"]) + h1 + h2 + h3 + h4),
                params["g5"], params["be5"])
        output = jax.nn.sigmoid(lin(h5, params["wr"], params["br"]))
        latent = jax.nn.sigmoid(lin(xi, params["wl"], params["bl"]))
        return jnp.dot(output.astype(jnp.bfloat16),
                       latent.astype(jnp.bfloat16),
                       preferred_element_type=jnp.float32)

    return jax.vmap(one)(x)


if __name__ == "__main__":
    # Small shapes implied by the module: per-instance x is [batch, latent_dim].
    # The final matmul requires input_dim == batch.
    num_instances = 4       # independent decoder calls fused into one launch
    batch = 16
    latent_dim = 8
    hidden_dim = 32
    input_dim = 16

    key = jax.random.PRNGKey(0)
    k_x, k_p = jax.random.split(key)
    x = jax.random.normal(k_x, (num_instances, batch, latent_dim), jnp.float32)
    params = init_params(k_p, latent_dim, hidden_dim, input_dim)

    out = decoder_forward(x, params)
    out = jax.block_until_ready(out)

    ref = decoder_forward_ref(x, params)
    assert out.shape == (num_instances, batch, input_dim)
    assert jnp.allclose(out, ref, atol=1e-2, rtol=1e-2), "mismatch vs JAX reference"

    print("KERNEL_OK")
</pallas_src>

<mosaic_0001>
module attributes {stable_mosaic.version = 11 : i64} {
  func.func @decoder_kernel(%arg0: memref<64x8xf32, #tpu.memory_space<vmem>>, %arg1: memref<8x32xbf16, #tpu.memory_space<vmem>>, %arg2: memref<1x32xf32, #tpu.memory_space<vmem>>, %arg3: memref<1x32xf32, #tpu.memory_space<vmem>>, %arg4: memref<1x32xf32, #tpu.memory_space<vmem>>, %arg5: memref<32x32xbf16, #tpu.memory_space<vmem>>, %arg6: memref<1x32xf32, #tpu.memory_space<vmem>>, %arg7: memref<1x32xf32, #tpu.memory_space<vmem>>, %arg8: memref<1x32xf32, #tpu.memory_space<vmem>>, %arg9: memref<32x32xbf16, #tpu.memory_space<vmem>>, %arg10: memref<1x32xf32, #tpu.memory_space<vmem>>, %arg11: memref<1x32xf32, #tpu.memory_space<vmem>>, %arg12: memref<1x32xf32, #tpu.memory_space<vmem>>, %arg13: memref<32x32xbf16, #tpu.memory_space<vmem>>, %arg14: memref<1x32xf32, #tpu.memory_space<vmem>>, %arg15: memref<1x32xf32, #tpu.memory_space<vmem>>, %arg16: memref<1x32xf32, #tpu.memory_space<vmem>>, %arg17: memref<32x32xbf16, #tpu.memory_space<vmem>>, %arg18: memref<1x32xf32, #tpu.memory_space<vmem>>, %arg19: memref<1x32xf32, #tpu.memory_space<vmem>>, %arg20: memref<1x32xf32, #tpu.memory_space<vmem>>, %arg21: memref<32x16xbf16, #tpu.memory_space<vmem>>, %arg22: memref<1x16xf32, #tpu.memory_space<vmem>>, %arg23: memref<8x16xbf16, #tpu.memory_space<vmem>>, %arg24: memref<1x16xf32, #tpu.memory_space<vmem>>, %arg25: memref<4x16x16xf32, #tpu.memory_space<vmem>>) attributes {dimension_semantics = [], scalar_prefetch = 0 : i64, scratch_operands = 0 : i64, tpu.core_type = #tpu.core_type<tc>} {
    %c0 = arith.constant 0 : index
    %c0_0 = arith.constant 0 : index
    %0 = vector.load %arg0[%c0, %c0_0] : memref<64x8xf32, #tpu.memory_space<vmem>>, vector<64x8xf32>
    %1 = arith.truncf %0 : vector<64x8xf32> to vector<64x8xbf16>
    %c0_1 = arith.constant 0 : index
    %c0_2 = arith.constant 0 : index
    %2 = vector.load %arg1[%c0_1, %c0_2] : memref<8x32xbf16, #tpu.memory_space<vmem>>, vector<8x32xbf16>
    %cst = arith.constant dense<0.000000e+00> : vector<64x32xf32>
    %3 = tpu.matmul %1, %2, %cst {dimension_numbers = #tpu.dot_dimension_numbers<[1], [0], [0], [1], [0, 0, 1, 1], [], []>} : vector<64x8xbf16>, vector<8x32xbf16>, vector<64x32xf32> -> vector<64x32xf32>
    %c0_3 = arith.constant 0 : index
    %c0_4 = arith.constant 0 : index
    %4 = vector.load %arg2[%c0_3, %c0_4] : memref<1x32xf32, #tpu.memory_space<vmem>>, vector<1x32xf32>
    %5 = vector.broadcast %4 : vector<1x32xf32> to vector<64x32xf32>
    %6 = arith.addf %3, %5 : vector<64x32xf32>
    %cst_5 = arith.constant 0.000000e+00 : f32
    %7 = vector.broadcast %cst_5 : f32 to vector<64x32xf32>
    %8 = arith.subf %7, %6 : vector<64x32xf32>
    %9 = math.exp %8 : vector<64x32xf32>
    %cst_6 = arith.constant 1.000000e+00 : f32
    %10 = vector.broadcast %cst_6 : f32 to vector<64x32xf32>
    %11 = arith.addf %10, %9 : vector<64x32xf32>
    %12 = tpu.reciprocal %11 {approx = true} : vector<64x32xf32> -> vector<64x32xf32>
    %13 = arith.mulf %6, %12 : vector<64x32xf32>
    %c0_7 = arith.constant 0 : index
    %c0_8 = arith.constant 0 : index
    %14 = vector.load %arg3[%c0_7, %c0_8] : memref<1x32xf32, #tpu.memory_space<vmem>>, vector<1x32xf32>
    %c0_9 = arith.constant 0 : index
    %c0_10 = arith.constant 0 : index
    %15 = vector.load %arg4[%c0_9, %c0_10] : memref<1x32xf32, #tpu.memory_space<vmem>>, vector<1x32xf32>
    %cst_11 = arith.constant dense<0.000000e+00> : vector<64xf32>
    %16 = vector.multi_reduction <add>, %13, %cst_11 [1] : vector<64x32xf32> to vector<64xf32>
    %17 = vector.shape_cast %16 : vector<64xf32> to vector<64x1xf32>
    %cst_12 = arith.constant 3.200000e+01 : f32
    %18 = vector.broadcast %cst_12 : f32 to vector<64x1xf32>
    %19 = arith.divf %17, %18 : vector<64x1xf32>
    %20 = vector.broadcast %19 : vector<64x1xf32> to vector<64x32xf32>
    %21 = arith.subf %13, %20 : vector<64x32xf32>
    %22 = arith.mulf %21, %21 : vector<64x32xf32>
    %cst_13 = arith.constant dense<0.000000e+00> : vector<64xf32>
    %23 = vector.multi_reduction <add>, %22, %cst_13 [1] : vector<64x32xf32> to vector<64xf32>
    %24 = vector.shape_cast %23 : vector<64xf32> to vector<64x1xf32>
    %cst_14 = arith.constant 3.200000e+01 : f32
    %25 = vector.broadcast %cst_14 : f32 to vector<64x1xf32>
    %26 = arith.divf %24, %25 : vector<64x1xf32>
    %cst_15 = arith.constant 1.000000e-01 : f32
    %27 = vector.broadcast %cst_15 : f32 to vector<64x1xf32>
    %28 = arith.addf %26, %27 : vector<64x1xf32>
    %29 = math.rsqrt %28 : vector<64x1xf32>
    %30 = vector.broadcast %29 : vector<64x1xf32> to vector<64x32xf32>
    %31 = arith.mulf %21, %30 : vector<64x32xf32>
    %32 = vector.broadcast %14 : vector<1x32xf32> to vector<64x32xf32>
    %33 = arith.mulf %31, %32 : vector<64x32xf32>
    %34 = vector.broadcast %15 : vector<1x32xf32> to vector<64x32xf32>
    %35 = arith.addf %33, %34 : vector<64x32xf32>
    %36 = arith.truncf %35 : vector<64x32xf32> to vector<64x32xbf16>
    %c0_16 = arith.constant 0 : index
    %c0_17 = arith.constant 0 : index
    %37 = vector.load %arg5[%c0_16, %c0_17] : memref<32x32xbf16, #tpu.memory_space<vmem>>, vector<32x32xbf16>
    %cst_18 = arith.constant dense<0.000000e+00> : vector<64x32xf32>
    %38 = tpu.matmul %36, %37, %cst_18 {dimension_numbers = #tpu.dot_dimension_numbers<[1], [0], [0], [1], [0, 0, 1, 1], [], []>} : vector<64x32xbf16>, vector<32x32xbf16>, vector<64x32xf32> -> vector<64x32xf32>
    %c0_19 = arith.constant 0 : index
    %c0_20 = arith.constant 0 : index
    %39 = vector.load %arg6[%c0_19, %c0_20] : memref<1x32xf32, #tpu.memory_space<vmem>>, vector<1x32xf32>
    %40 = vector.broadcast %39 : vector<1x32xf32> to vector<64x32xf32>
    %41 = arith.addf %38, %40 : vector<64x32xf32>
    %42 = arith.addf %41, %35 : vector<64x32xf32>
    %cst_21 = arith.constant 0.000000e+00 : f32
    %43 = vector.broadcast %cst_21 : f32 to vector<64x32xf32>
    %44 = arith.subf %43, %42 : vector<64x32xf32>
    %45 = math.exp %44 : vector<64x32xf32>
    %cst_22 = arith.constant 1.000000e+00 : f32
    %46 = vector.broadcast %cst_22 : f32 to vector<64x32xf32>
    %47 = arith.addf %46, %45 : vector<64x32xf32>
    %48 = tpu.reciprocal %47 {approx = true} : vector<64x32xf32> -> vector<64x32xf32>
    %49 = arith.mulf %42, %48 : vector<64x32xf32>
    %c0_23 = arith.constant 0 : index
    %c0_24 = arith.constant 0 : index
    %50 = vector.load %arg7[%c0_23, %c0_24] : memref<1x32xf32, #tpu.memory_space<vmem>>, vector<1x32xf32>
    %c0_25 = arith.constant 0 : index
    %c0_26 = arith.constant 0 : index
    %51 = vector.load %arg8[%c0_25, %c0_26] : memref<1x32xf32, #tpu.memory_space<vmem>>, vector<1x32xf32>
    %cst_27 = arith.constant dense<0.000000e+00> : vector<64xf32>
    %52 = vector.multi_reduction <add>, %49, %cst_27 [1] : vector<64x32xf32> to vector<64xf32>
    %53 = vector.shape_cast %52 : vector<64xf32> to vector<64x1xf32>
    %cst_28 = arith.constant 3.200000e+01 : f32
    %54 = vector.broadcast %cst_28 : f32 to vector<64x1xf32>
    %55 = arith.divf %53, %54 : vector<64x1xf32>
    %56 = vector.broadcast %55 : vector<64x1xf32> to vector<64x32xf32>
    %57 = arith.subf %49, %56 : vector<64x32xf32>
    %58 = arith.mulf %57, %57 : vector<64x32xf32>
    %cst_29 = arith.constant dense<0.000000e+00> : vector<64xf32>
    %59 = vector.multi_reduction <add>, %58, %cst_29 [1] : vector<64x32xf32> to vector<64xf32>
    %60 = vector.shape_cast %59 : vector<64xf32> to vector<64x1xf32>
    %cst_30 = arith.constant 3.200000e+01 : f32
    %61 = vector.broadcast %cst_30 : f32 to vector<64x1xf32>
    %62 = arith.divf %60, %61 : vector<64x1xf32>
    %cst_31 = arith.constant 1.000000e-01 : f32
    %63 = vector.broadcast %cst_31 : f32 to vector<64x1xf32>
    %64 = arith.addf %62, %63 : vector<64x1xf32>
    %65 = math.rsqrt %64 : vector<64x1xf32>
    %66 = vector.broadcast %65 : vector<64x1xf32> to vector<64x32xf32>
    %67 = arith.mulf %57, %66 : vector<64x32xf32>
    %68 = vector.broadcast %50 : vector<1x32xf32> to vector<64x32xf32>
    %69 = arith.mulf %67, %68 : vector<64x32xf32>
    %70 = vector.broadcast %51 : vector<1x32xf32> to vector<64x32xf32>
    %71 = arith.addf %69, %70 : vector<64x32xf32>
    %72 = arith.addf %35, %71 : vector<64x32xf32>
    %73 = arith.truncf %71 : vector<64x32xf32> to vector<64x32xbf16>
    %c0_32 = arith.constant 0 : index
    %c0_33 = arith.constant 0 : index
    %74 = vector.load %arg9[%c0_32, %c0_33] : memref<32x32xbf16, #tpu.memory_space<vmem>>, vector<32x32xbf16>
    %cst_34 = arith.constant dense<0.000000e+00> : vector<64x32xf32>
    %75 = tpu.matmul %73, %74, %cst_34 {dimension_numbers = #tpu.dot_dimension_numbers<[1], [0], [0], [1], [0, 0, 1, 1], [], []>} : vector<64x32xbf16>, vector<32x32xbf16>, vector<64x32xf32> -> vector<64x32xf32>
    %c0_35 = arith.constant 0 : index
    %c0_36 = arith.constant 0 : index
    %76 = vector.load %arg10[%c0_35, %c0_36] : memref<1x32xf32, #tpu.memory_space<vmem>>, vector<1x32xf32>
    %77 = vector.broadcast %76 : vector<1x32xf32> to vector<64x32xf32>
    %78 = arith.addf %75, %77 : vector<64x32xf32>
    %79 = arith.addf %78, %72 : vector<64x32xf32>
    %cst_37 = arith.constant 0.000000e+00 : f32
    %80 = vector.broadcast %cst_37 : f32 to vector<64x32xf32>
    %81 = arith.subf %80, %79 : vector<64x32xf32>
    %82 = math.exp %81 : vector<64x32xf32>
    %cst_38 = arith.constant 1.000000e+00 : f32
    %83 = vector.broadcast %cst_38 : f32 to vector<64x32xf32>
    %84 = arith.addf %83, %82 : vector<64x32xf32>
    %85 = tpu.reciprocal %84 {approx = true} : vector<64x32xf32> -> vector<64x32xf32>
    %86 = arith.mulf %79, %85 : vector<64x32xf32>
    %c0_39 = arith.constant 0 : index
    %c0_40 = arith.constant 0 : index
    %87 = vector.load %arg11[%c0_39, %c0_40] : memref<1x32xf32, #tpu.memory_space<vmem>>, vector<1x32xf32>
    %c0_41 = arith.constant 0 : index
    %c0_42 = arith.constant 0 : index
    %88 = vector.load %arg12[%c0_41, %c0_42] : memref<1x32xf32, #tpu.memory_space<vmem>>, vector<1x32xf32>
    %cst_43 = arith.constant dense<0.000000e+00> : vector<64xf32>
    %89 = vector.multi_reduction <add>, %86, %cst_43 [1] : vector<64x32xf32> to vector<64xf32>
    %90 = vector.shape_cast %89 : vector<64xf32> to vector<64x1xf32>
    %cst_44 = arith.constant 3.200000e+01 : f32
    %91 = vector.broadcast %cst_44 : f32 to vector<64x1xf32>
    %92 = arith.divf %90, %91 : vector<64x1xf32>
    %93 = vector.broadcast %92 : vector<64x1xf32> to vector<64x32xf32>
    %94 = arith.subf %86, %93 : vector<64x32xf32>
    %95 = arith.mulf %94, %94 : vector<64x32xf32>
    %cst_45 = arith.constant dense<0.000000e+00> : vector<64xf32>
    %96 = vector.multi_reduction <add>, %95, %cst_45 [1] : vector<64x32xf32> to vector<64xf32>
    %97 = vector.shape_cast %96 : vector<64xf32> to vector<64x1xf32>
    %cst_46 = arith.constant 3.200000e+01 : f32
    %98 = vector.broadcast %cst_46 : f32 to vector<64x1xf32>
    %99 = arith.divf %97, %98 : vector<64x1xf32>
    %cst_47 = arith.constant 1.000000e-01 : f32
    %100 = vector.broadcast %cst_47 : f32 to vector<64x1xf32>
    %101 = arith.addf %99, %100 : vector<64x1xf32>
    %102 = math.rsqrt %101 : vector<64x1xf32>
    %103 = vector.broadcast %102 : vector<64x1xf32> to vector<64x32xf32>
    %104 = arith.mulf %94, %103 : vector<64x32xf32>
    %105 = vector.broadcast %87 : vector<1x32xf32> to vector<64x32xf32>
    %106 = arith.mulf %104, %105 : vector<64x32xf32>
    %107 = vector.broadcast %88 : vector<1x32xf32> to vector<64x32xf32>
    %108 = arith.addf %106, %107 : vector<64x32xf32>
    %109 = arith.addf %72, %108 : vector<64x32xf32>
    %110 = arith.truncf %108 : vector<64x32xf32> to vector<64x32xbf16>
    %c0_48 = arith.constant 0 : index
    %c0_49 = arith.constant 0 : index
    %111 = vector.load %arg13[%c0_48, %c0_49] : memref<32x32xbf16, #tpu.memory_space<vmem>>, vector<32x32xbf16>
    %cst_50 = arith.constant dense<0.000000e+00> : vector<64x32xf32>
    %112 = tpu.matmul %110, %111, %cst_50 {dimension_numbers = #tpu.dot_dimension_numbers<[1], [0], [0], [1], [0, 0, 1, 1], [], []>} : vector<64x32xbf16>, vector<32x32xbf16>, vector<64x32xf32> -> vector<64x32xf32>
    %c0_51 = arith.constant 0 : index
    %c0_52 = arith.constant 0 : index
    %113 = vector.load %arg14[%c0_51, %c0_52] : memref<1x32xf32, #tpu.memory_space<vmem>>, vector<1x32xf32>
    %114 = vector.broadcast %113 : vector<1x32xf32> to vector<64x32xf32>
    %115 = arith.addf %112, %114 : vector<64x32xf32>
    %116 = arith.addf %115, %109 : vector<64x32xf32>
    %cst_53 = arith.constant 0.000000e+00 : f32
    %117 = vector.broadcast %cst_53 : f32 to vector<64x32xf32>
    %118 = arith.subf %117, %116 : vector<64x32xf32>
    %119 = math.exp %118 : vector<64x32xf32>
    %cst_54 = arith.constant 1.000000e+00 : f32
    %120 = vector.broadcast %cst_54 : f32 to vector<64x32xf32>
    %121 = arith.addf %120, %119 : vector<64x32xf32>
    %122 = tpu.reciprocal %121 {approx = true} : vector<64x32xf32> -> vector<64x32xf32>
    %123 = arith.mulf %116, %122 : vector<64x32xf32>
    %c0_55 = arith.constant 0 : index
    %c0_56 = arith.constant 0 : index
    %124 = vector.load %arg15[%c0_55, %c0_56] : memref<1x32xf32, #tpu.memory_space<vmem>>, vector<1x32xf32>
    %c0_57 = arith.constant 0 : index
    %c0_58 = arith.constant 0 : index
    %125 = vector.load %arg16[%c0_57, %c0_58] : memref<1x32xf32, #tpu.memory_space<vmem>>, vector<1x32xf32>
    %cst_59 = arith.constant dense<0.000000e+00> : vector<64xf32>
    %126 = vector.multi_reduction <add>, %123, %cst_59 [1] : vector<64x32xf32> to vector<64xf32>
    %127 = vector.shape_cast %126 : vector<64xf32> to vector<64x1xf32>
    %cst_60 = arith.constant 3.200000e+01 : f32
    %128 = vector.broadcast %cst_60 : f32 to vector<64x1xf32>
    %129 = arith.divf %127, %128 : vector<64x1xf32>
    %130 = vector.broadcast %129 : vector<64x1xf32> to vector<64x32xf32>
    %131 = arith.subf %123, %130 : vector<64x32xf32>
    %132 = arith.mulf %131, %131 : vector<64x32xf32>
    %cst_61 = arith.constant dense<0.000000e+00> : vector<64xf32>
    %133 = vector.multi_reduction <add>, %132, %cst_61 [1] : vector<64x32xf32> to vector<64xf32>
    %134 = vector.shape_cast %133 : vector<64xf32> to vector<64x1xf32>
    %cst_62 = arith.constant 3.200000e+01 : f32
    %135 = vector.broadcast %cst_62 : f32 to vector<64x1xf32>
    %136 = arith.divf %134, %135 : vector<64x1xf32>
    %cst_63 = arith.constant 1.000000e-01 : f32
    %137 = vector.broadcast %cst_63 : f32 to vector<64x1xf32>
    %138 = arith.addf %136, %137 : vector<64x1xf32>
    %139 = math.rsqrt %138 : vector<64x1xf32>
    %140 = vector.broadcast %139 : vector<64x1xf32> to vector<64x32xf32>
    %141 = arith.mulf %131, %140 : vector<64x32xf32>
    %142 = vector.broadcast %124 : vector<1x32xf32> to vector<64x32xf32>
    %143 = arith.mulf %141, %142 : vector<64x32xf32>
    %144 = vector.broadcast %125 : vector<1x32xf32> to vector<64x32xf32>
    %145 = arith.addf %143, %144 : vector<64x32xf32>
    %146 = arith.addf %109, %145 : vector<64x32xf32>
    %147 = arith.truncf %145 : vector<64x32xf32> to vector<64x32xbf16>
    %c0_64 = arith.constant 0 : index
    %c0_65 = arith.constant 0 : index
    %148 = vector.load %arg17[%c0_64, %c0_65] : memref<32x32xbf16, #tpu.memory_space<vmem>>, vector<32x32xbf16>
    %cst_66 = arith.constant dense<0.000000e+00> : vector<64x32xf32>
    %149 = tpu.matmul %147, %148, %cst_66 {dimension_numbers = #tpu.dot_dimension_numbers<[1], [0], [0], [1], [0, 0, 1, 1], [], []>} : vector<64x32xbf16>, vector<32x32xbf16>, vector<64x32xf32> -> vector<64x32xf32>
    %c0_67 = arith.constant 0 : index
    %c0_68 = arith.constant 0 : index
    %150 = vector.load %arg18[%c0_67, %c0_68] : memref<1x32xf32, #tpu.memory_space<vmem>>, vector<1x32xf32>
    %151 = vector.broadcast %150 : vector<1x32xf32> to vector<64x32xf32>
    %152 = arith.addf %149, %151 : vector<64x32xf32>
    %153 = arith.addf %152, %146 : vector<64x32xf32>
    %cst_69 = arith.constant 0.000000e+00 : f32
    %154 = vector.broadcast %cst_69 : f32 to vector<64x32xf32>
    %155 = arith.subf %154, %153 : vector<64x32xf32>
    %156 = math.exp %155 : vector<64x32xf32>
    %cst_70 = arith.constant 1.000000e+00 : f32
    %157 = vector.broadcast %cst_70 : f32 to vector<64x32xf32>
    %158 = arith.addf %157, %156 : vector<64x32xf32>
    %159 = tpu.reciprocal %158 {approx = true} : vector<64x32xf32> -> vector<64x32xf32>
    %160 = arith.mulf %153, %159 : vector<64x32xf32>
    %c0_71 = arith.constant 0 : index
    %c0_72 = arith.constant 0 : index
    %161 = vector.load %arg19[%c0_71, %c0_72] : memref<1x32xf32, #tpu.memory_space<vmem>>, vector<1x32xf32>
    %c0_73 = arith.constant 0 : index
    %c0_74 = arith.constant 0 : index
    %162 = vector.load %arg20[%c0_73, %c0_74] : memref<1x32xf32, #tpu.memory_space<vmem>>, vector<1x32xf32>
    %cst_75 = arith.constant dense<0.000000e+00> : vector<64xf32>
    %163 = vector.multi_reduction <add>, %160, %cst_75 [1] : vector<64x32xf32> to vector<64xf32>
    %164 = vector.shape_cast %163 : vector<64xf32> to vector<64x1xf32>
    %cst_76 = arith.constant 3.200000e+01 : f32
    %165 = vector.broadcast %cst_76 : f32 to vector<64x1xf32>
    %166 = arith.divf %164, %165 : vector<64x1xf32>
    %167 = vector.broadcast %166 : vector<64x1xf32> to vector<64x32xf32>
    %168 = arith.subf %160, %167 : vector<64x32xf32>
    %169 = arith.mulf %168, %168 : vector<64x32xf32>
    %cst_77 = arith.constant dense<0.000000e+00> : vector<64xf32>
    %170 = vector.multi_reduction <add>, %169, %cst_77 [1] : vector<64x32xf32> to vector<64xf32>
    %171 = vector.shape_cast %170 : vector<64xf32> to vector<64x1xf32>
    %cst_78 = arith.constant 3.200000e+01 : f32
    %172 = vector.broadcast %cst_78 : f32 to vector<64x1xf32>
    %173 = arith.divf %171, %172 : vector<64x1xf32>
    %cst_79 = arith.constant 1.000000e-01 : f32
    %174 = vector.broadcast %cst_79 : f32 to vector<64x1xf32>
    %175 = arith.addf %173, %174 : vector<64x1xf32>
    %176 = math.rsqrt %175 : vector<64x1xf32>
    %177 = vector.broadcast %176 : vector<64x1xf32> to vector<64x32xf32>
    %178 = arith.mulf %168, %177 : vector<64x32xf32>
    %179 = vector.broadcast %161 : vector<1x32xf32> to vector<64x32xf32>
    %180 = arith.mulf %178, %179 : vector<64x32xf32>
    %181 = vector.broadcast %162 : vector<1x32xf32> to vector<64x32xf32>
    %182 = arith.addf %180, %181 : vector<64x32xf32>
    %183 = arith.truncf %182 : vector<64x32xf32> to vector<64x32xbf16>
    %c0_80 = arith.constant 0 : index
    %c0_81 = arith.constant 0 : index
    %184 = vector.load %arg21[%c0_80, %c0_81] : memref<32x16xbf16, #tpu.memory_space<vmem>>, vector<32x16xbf16>
    %cst_82 = arith.constant dense<0.000000e+00> : vector<64x16xf32>
    %185 = tpu.matmul %183, %184, %cst_82 {dimension_numbers = #tpu.dot_dimension_numbers<[1], [0], [0], [1], [0, 0, 1, 1], [], []>} : vector<64x32xbf16>, vector<32x16xbf16>, vector<64x16xf32> -> vector<64x16xf32>
    %c0_83 = arith.constant 0 : index
    %c0_84 = arith.constant 0 : index
    %186 = vector.load %arg22[%c0_83, %c0_84] : memref<1x16xf32, #tpu.memory_space<vmem>>, vector<1x16xf32>
    %187 = vector.broadcast %186 : vector<1x16xf32> to vector<64x16xf32>
    %188 = arith.addf %185, %187 : vector<64x16xf32>
    %cst_85 = arith.constant 0.000000e+00 : f32
    %189 = vector.broadcast %cst_85 : f32 to vector<64x16xf32>
    %190 = arith.subf %189, %188 : vector<64x16xf32>
    %191 = math.exp %190 : vector<64x16xf32>
    %cst_86 = arith.constant 1.000000e+00 : f32
    %192 = vector.broadcast %cst_86 : f32 to vector<64x16xf32>
    %193 = arith.addf %192, %191 : vector<64x16xf32>
    %194 = tpu.reciprocal %193 {approx = true} : vector<64x16xf32> -> vector<64x16xf32>
    %195 = arith.truncf %194 : vector<64x16xf32> to vector<64x16xbf16>
    %196 = arith.truncf %0 : vector<64x8xf32> to vector<64x8xbf16>
    %c0_87 = arith.constant 0 : index
    %c0_88 = arith.constant 0 : index
    %197 = vector.load %arg23[%c0_87, %c0_88] : memref<8x16xbf16, #tpu.memory_space<vmem>>, vector<8x16xbf16>
    %cst_89 = arith.constant dense<0.000000e+00> : vector<64x16xf32>
    %198 = tpu.matmul %196, %197, %cst_89 {dimension_numbers = #tpu.dot_dimension_numbers<[1], [0], [0], [1], [0, 0, 1, 1], [], []>} : vector<64x8xbf16>, vector<8x16xbf16>, vector<64x16xf32> -> vector<64x16xf32>
    %c0_90 = arith.constant 0 : index
    %c0_91 = arith.constant 0 : index
    %199 = vector.load %arg24[%c0_90, %c0_91] : memref<1x16xf32, #tpu.memory_space<vmem>>, vector<1x16xf32>
    %200 = vector.broadcast %199 : vector<1x16xf32> to vector<64x16xf32>
    %201 = arith.addf %198, %200 : vector<64x16xf32>
    %cst_92 = arith.constant 0.000000e+00 : f32
    %202 = vector.broadcast %cst_92 : f32 to vector<64x16xf32>
    %203 = arith.subf %202, %201 : vector<64x16xf32>
    %204 = math.exp %203 : vector<64x16xf32>
    %cst_93 = arith.constant 1.000000e+00 : f32
    %205 = vector.broadcast %cst_93 : f32 to vector<64x16xf32>
    %206 = arith.addf %205, %204 : vector<64x16xf32>
    %207 = tpu.reciprocal %206 {approx = true} : vector<64x16xf32> -> vector<64x16xf32>
    %208 = arith.truncf %207 : vector<64x16xf32> to vector<64x16xbf16>
    %209 = vector.extract_strided_slice %195 {offsets = [0, 0], sizes = [16, 16], strides = [1, 1]} : vector<64x16xbf16> to vector<16x16xbf16>
    %210 = vector.extract_strided_slice %208 {offsets = [0, 0], sizes = [16, 16], strides = [1, 1]} : vector<64x16xbf16> to vector<16x16xbf16>
    %cst_94 = arith.constant dense<0.000000e+00> : vector<16x16xf32>
    %211 = tpu.matmul %209, %210, %cst_94 {dimension_numbers = #tpu.dot_dimension_numbers<[1], [0], [0], [1], [0, 0, 1, 1], [], []>} : vector<16x16xbf16>, vector<16x16xbf16>, vector<16x16xf32> -> vector<16x16xf32>
    %c0_95 = arith.constant 0 : index
    %c0_96 = arith.constant 0 : index
    %c0_97 = arith.constant 0 : index
    %212 = vector.load %arg25[%c0_95, %c0_96, %c0_97] : memref<4x16x16xf32, #tpu.memory_space<vmem>>, vector<1x16x16xf32>
    %213 = vector.shape_cast %212 : vector<1x16x16xf32> to vector<16x16xf32>
    %214 = vector.shape_cast %211 : vector<16x16xf32> to vector<1x16x16xf32>
    tpu.vector_store %arg25[%c0_95, %c0_96, %c0_97], %214 {strides = array<i32>} : memref<4x16x16xf32, #tpu.memory_space<vmem>>, vector<1x16x16xf32>,
    %215 = vector.extract_strided_slice %195 {offsets = [16, 0], sizes = [16, 16], strides = [1, 1]} : vector<64x16xbf16> to vector<16x16xbf16>
    %216 = vector.extract_strided_slice %208 {offsets = [16, 0], sizes = [16, 16], strides = [1, 1]} : vector<64x16xbf16> to vector<16x16xbf16>
    %cst_98 = arith.constant dense<0.000000e+00> : vector<16x16xf32>
    %217 = tpu.matmul %215, %216, %cst_98 {dimension_numbers = #tpu.dot_dimension_numbers<[1], [0], [0], [1], [0, 0, 1, 1], [], []>} : vector<16x16xbf16>, vector<16x16xbf16>, vector<16x16xf32> -> vector<16x16xf32>
    %c1 = arith.constant 1 : index
    %c0_99 = arith.constant 0 : index
    %c0_100 = arith.constant 0 : index
    %218 = vector.load %arg25[%c1, %c0_99, %c0_100] : memref<4x16x16xf32, #tpu.memory_space<vmem>>, vector<1x16x16xf32>
    %219 = vector.shape_cast %218 : vector<1x16x16xf32> to vector<16x16xf32>
    %220 = vector.shape_cast %217 : vector<16x16xf32> to vector<1x16x16xf32>
    tpu.vector_store %arg25[%c1, %c0_99, %c0_100], %220 {strides = array<i32>} : memref<4x16x16xf32, #tpu.memory_space<vmem>>, vector<1x16x16xf32>,
    %221 = vector.extract_strided_slice %195 {offsets = [32, 0], sizes = [16, 16], strides = [1, 1]} : vector<64x16xbf16> to vector<16x16xbf16>
    %222 = vector.extract_strided_slice %208 {offsets = [32, 0], sizes = [16, 16], strides = [1, 1]} : vector<64x16xbf16> to vector<16x16xbf16>
    %cst_101 = arith.constant dense<0.000000e+00> : vector<16x16xf32>
    %223 = tpu.matmul %221, %222, %cst_101 {dimension_numbers = #tpu.dot_dimension_numbers<[1], [0], [0], [1], [0, 0, 1, 1], [], []>} : vector<16x16xbf16>, vector<16x16xbf16>, vector<16x16xf32> -> vector<16x16xf32>
    %c2 = arith.constant 2 : index
    %c0_102 = arith.constant 0 : index
    %c0_103 = arith.constant 0 : index
    %224 = vector.load %arg25[%c2, %c0_102, %c0_103] : memref<4x16x16xf32, #tpu.memory_space<vmem>>, vector<1x16x16xf32>
    %225 = vector.shape_cast %224 : vector<1x16x16xf32> to vector<16x16xf32>
    %226 = vector.shape_cast %223 : vector<16x16xf32> to vector<1x16x16xf32>
    tpu.vector_store %arg25[%c2, %c0_102, %c0_103], %226 {strides = array<i32>} : memref<4x16x16xf32, #tpu.memory_space<vmem>>, vector<1x16x16xf32>,
    %227 = vector.extract_strided_slice %195 {offsets = [48, 0], sizes = [16, 16], strides = [1, 1]} : vector<64x16xbf16> to vector<16x16xbf16>
    %228 = vector.extract_strided_slice %208 {offsets = [48, 0], sizes = [16, 16], strides = [1, 1]} : vector<64x16xbf16> to vector<16x16xbf16>
    %cst_104 = arith.constant dense<0.000000e+00> : vector<16x16xf32>
    %229 = tpu.matmul %227, %228, %cst_104 {dimension_numbers = #tpu.dot_dimension_numbers<[1], [0], [0], [1], [0, 0, 1, 1], [], []>} : vector<16x16xbf16>, vector<16x16xbf16>, vector<16x16xf32> -> vector<16x16xf32>
    %c3 = arith.constant 3 : index
    %c0_105 = arith.constant 0 : index
    %c0_106 = arith.constant 0 : index
    %230 = vector.load %arg25[%c3, %c0_105, %c0_106] : memref<4x16x16xf32, #tpu.memory_space<vmem>>, vector<1x16x16xf32>
    %231 = vector.shape_cast %230 : vector<1x16x16xf32> to vector<16x16xf32>
    %232 = vector.shape_cast %229 : vector<16x16xf32> to vector<1x16x16xf32>
    tpu.vector_store %arg25[%c3, %c0_105, %c0_106], %232 {strides = array<i32>} : memref<4x16x16xf32, #tpu.memory_space<vmem>>, vector<1x16x16xf32>,
    return
  }
}

</mosaic_0001>

<llo_original>
// kernel: tpu_custom_call.1
$region0: #{tpu_custom_call.1}
  #allocation0 [shape = 'u32[]', space=smem, size = 0x4, offset = 0x4, fixed_abs, tag = 'smem constant byte address 0x4 - core index']
  #allocation1 [shape = 'u32[144,128]{1,0:T(1,128)}', space=vmem, size = 0x12000, scoped, tag = 'internal scratch']
  %s0 = inlined_call_operand.vmem [shape: f32[64,8], index: 0, kind: input, shape index: {}]
  %s1 = inlined_call_operand.vmem [shape: bf16[8,32], index: 1, kind: input, shape index: {}]
  %s2 = inlined_call_operand.vmem [shape: f32[1,32], index: 2, kind: input, shape index: {}]
  %s3 = inlined_call_operand.vmem [shape: f32[1,32], index: 3, kind: input, shape index: {}]
  %s4 = inlined_call_operand.vmem [shape: f32[1,32], index: 4, kind: input, shape index: {}]
  %s5 = inlined_call_operand.vmem [shape: bf16[32,32], index: 5, kind: input, shape index: {}]
  %s6 = inlined_call_operand.vmem [shape: f32[1,32], index: 6, kind: input, shape index: {}]
  %s7 = inlined_call_operand.vmem [shape: f32[1,32], index: 7, kind: input, shape index: {}]
  %s8 = inlined_call_operand.vmem [shape: f32[1,32], index: 8, kind: input, shape index: {}]
  %s9 = inlined_call_operand.vmem [shape: bf16[32,32], index: 9, kind: input, shape index: {}]
  %s10 = inlined_call_operand.vmem [shape: f32[1,32], index: 10, kind: input, shape index: {}]
  %s11 = inlined_call_operand.vmem [shape: f32[1,32], index: 11, kind: input, shape index: {}]
  %s12 = inlined_call_operand.vmem [shape: f32[1,32], index: 12, kind: input, shape index: {}]
  %s13 = inlined_call_operand.vmem [shape: bf16[32,32], index: 13, kind: input, shape index: {}]
  %s14 = inlined_call_operand.vmem [shape: f32[1,32], index: 14, kind: input, shape index: {}]
  %s15 = inlined_call_operand.vmem [shape: f32[1,32], index: 15, kind: input, shape index: {}]
  %s16 = inlined_call_operand.vmem [shape: f32[1,32], index: 16, kind: input, shape index: {}]
  %s17 = inlined_call_operand.vmem [shape: bf16[32,32], index: 17, kind: input, shape index: {}]
  %s18 = inlined_call_operand.vmem [shape: f32[1,32], index: 18, kind: input, shape index: {}]
  %s19 = inlined_call_operand.vmem [shape: f32[1,32], index: 19, kind: input, shape index: {}]
  %s20 = inlined_call_operand.vmem [shape: f32[1,32], index: 20, kind: input, shape index: {}]
  %s21 = inlined_call_operand.vmem [shape: bf16[32,16], index: 21, kind: input, shape index: {}]
  %s22 = inlined_call_operand.vmem [shape: f32[1,16], index: 22, kind: input, shape index: {}]
  %s23 = inlined_call_operand.vmem [shape: bf16[8,16], index: 23, kind: input, shape index: {}]
  %s24 = inlined_call_operand.vmem [shape: f32[1,16], index: 24, kind: input, shape index: {}]
  %s25 = inlined_call_operand.hbm [shape: f32[4,16,16], index: 25, kind: output, shape index: {}]
  %s26 = sld [smem:[#allocation0]]
  $region110: #{tpu_custom_call.1} parent=0
    _
  %s28 = ssub.s32 1, %s26
  %s29 = scalar_select 0, %s28, %s26
  $region1: #{tpu_custom_call.1} parent=0
    #allocation2 [shape = 'u8[32768]{0}', space=vmem, size = 0x8000, scoped, tag = 'output window, operand 0, single buffered']
    #allocation3 [shape = 's32[1]{0}', space=sflag, size = 0x4, scoped, tag = 'scoped memory for tpu_custom_call.1']
    %30 = vsyncpa [#allocation3], 0
    // Predicated region
    $region2: #{tpu_custom_call.1} parent=1 // pred_check
      _
    $region3: #{tpu_custom_call.1} parent=1 // pred_check_branch
      %32 = sbr.rel (0) target = $region5
    $region4: #{tpu_custom_call.1} parent=1 // pred_region
      _
    $region5: #{tpu_custom_call.1} parent=1 // pred_fallthru
      _
    // Predicated region
    $region6: #{tpu_custom_call.1} parent=1 // pred_check
      _
    $region7: #{tpu_custom_call.1} parent=1 // pred_check_branch
      %34 = sbr.rel (0) target = $region9
    $region8: #{tpu_custom_call.1} parent=1 // pred_region
      _
    $region9: #{tpu_custom_call.1} parent=1 // pred_fallthru
      _
    // Predicated region
    $region10: #{tpu_custom_call.1} parent=1 // pred_check
      _
    $region11: #{tpu_custom_call.1} parent=1 // pred_check_branch
      %36 = sbr.rel (0) target = $region13
    $region12: #{tpu_custom_call.1} parent=1 // pred_region
      _
    $region13: #{tpu_custom_call.1} parent=1 // pred_fallthru
      _
    // Predicated region
    $region14: #{tpu_custom_call.1} parent=1 // pred_check
      _
    $region15: #{tpu_custom_call.1} parent=1 // pred_check_branch
      %38 = sbr.rel (0) target = $region17
    $region16: #{tpu_custom_call.1} parent=1 // pred_region
      _
    $region17: #{tpu_custom_call.1} parent=1 // pred_fallthru
      _
    // Predicated region
    $region18: #{tpu_custom_call.1} parent=1 // pred_check
      _
    $region19: #{tpu_custom_call.1} parent=1 // pred_check_branch
      %40 = sbr.rel (0) target = $region21
    $region20: #{tpu_custom_call.1} parent=1 // pred_region
      _
    $region21: #{tpu_custom_call.1} parent=1 // pred_fallthru
      _
    // Predicated region
    $region22: #{tpu_custom_call.1} parent=1 // pred_check
      _
    $region23: #{tpu_custom_call.1} parent=1 // pred_check_branch
      %42 = sbr.rel (0) target = $region25
    $region24: #{tpu_custom_call.1} parent=1 // pred_region
      _
    $region25: #{tpu_custom_call.1} parent=1 // pred_fallthru
      _
    // Predicated region
    $region26: #{tpu_custom_call.1} parent=1 // pred_check
      _
    $region27: #{tpu_custom_call.1} parent=1 // pred_check_branch
      %44 = sbr.rel (0) target = $region29
    $region28: #{tpu_custom_call.1} parent=1 // pred_region
      _
    $region29: #{tpu_custom_call.1} parent=1 // pred_fallthru
      _
    // Predicated region
    $region30: #{tpu_custom_call.1} parent=1 // pred_check
      _
    $region31: #{tpu_custom_call.1} parent=1 // pred_check_branch
      %46 = sbr.rel (0) target = $region33
    $region32: #{tpu_custom_call.1} parent=1 // pred_region
      _
    $region33: #{tpu_custom_call.1} parent=1 // pred_fallthru
      _
    // Predicated region
    $region34: #{tpu_custom_call.1} parent=1 // pred_check
      _
    $region35: #{tpu_custom_call.1} parent=1 // pred_check_branch
      %48 = sbr.rel (0) target = $region37
    $region36: #{tpu_custom_call.1} parent=1 // pred_region
      _
    $region37: #{tpu_custom_call.1} parent=1 // pred_fallthru
      _
    // Predicated region
    $region38: #{tpu_custom_call.1} parent=1 // pred_check
      _
    $region39: #{tpu_custom_call.1} parent=1 // pred_check_branch
      %50 = sbr.rel (0) target = $region41
    $region40: #{tpu_custom_call.1} parent=1 // pred_region
      _
    $region41: #{tpu_custom_call.1} parent=1 // pred_fallthru
      _
    // Predicated region
    $region42: #{tpu_custom_call.1} parent=1 // pred_check
      _
    $region43: #{tpu_custom_call.1} parent=1 // pred_check_branch
      %52 = sbr.rel (0) target = $region45
    $region44: #{tpu_custom_call.1} parent=1 // pred_region
      _
    $region45: #{tpu_custom_call.1} parent=1 // pred_fallthru
      _
    // Predicated region
    $region46: #{tpu_custom_call.1} parent=1 // pred_check
      _
    $region47: #{tpu_custom_call.1} parent=1 // pred_check_branch
      %54 = sbr.rel (0) target = $region49
    $region48: #{tpu_custom_call.1} parent=1 // pred_region
      _
    $region49: #{tpu_custom_call.1} parent=1 // pred_fallthru
      _
    // Predicated region
    $region50: #{tpu_custom_call.1} parent=1 // pred_check
      _
    $region51: #{tpu_custom_call.1} parent=1 // pred_check_branch
      %56 = sbr.rel (0) target = $region53
    $region52: #{tpu_custom_call.1} parent=1 // pred_region
      _
    $region53: #{tpu_custom_call.1} parent=1 // pred_fallthru
      _
    // Predicated region
    $region54: #{tpu_custom_call.1} parent=1 // pred_check
      _
    $region55: #{tpu_custom_call.1} parent=1 // pred_check_branch
      %58 = sbr.rel (0) target = $region57
    $region56: #{tpu_custom_call.1} parent=1 // pred_region
      _
    $region57: #{tpu_custom_call.1} parent=1 // pred_fallthru
      _
    // Predicated region
    $region58: #{tpu_custom_call.1} parent=1 // pred_check
      _
    $region59: #{tpu_custom_call.1} parent=1 // pred_check_branch
      %60 = sbr.rel (0) target = $region61
    $region60: #{tpu_custom_call.1} parent=1 // pred_region
      _
    $region61: #{tpu_custom_call.1} parent=1 // pred_fallthru
      _
    // Predicated region
    $region62: #{tpu_custom_call.1} parent=1 // pred_check
      _
    $region63: #{tpu_custom_call.1} parent=1 // pred_check_branch
      %62 = sbr.rel (0) target = $region65
    $region64: #{tpu_custom_call.1} parent=1 // pred_region
      _
    $region65: #{tpu_custom_call.1} parent=1 // pred_fallthru
      _
    // Predicated region
    $region66: #{tpu_custom_call.1} parent=1 // pred_check
      _
    $region67: #{tpu_custom_call.1} parent=1 // pred_check_branch
      %64 = sbr.rel (0) target = $region69
    $region68: #{tpu_custom_call.1} parent=1 // pred_region
      _
    $region69: #{tpu_custom_call.1} parent=1 // pred_fallthru
      _
    // Predicated region
    $region70: #{tpu_custom_call.1} parent=1 // pred_check
      _
    $region71: #{tpu_custom_call.1} parent=1 // pred_check_branch
      %66 = sbr.rel (0) target = $region73
    $region72: #{tpu_custom_call.1} parent=1 // pred_region
      _
    $region73: #{tpu_custom_call.1} parent=1 // pred_fallthru
      _
    // Predicated region
    $region74: #{tpu_custom_call.1} parent=1 // pred_check
      _
    $region75: #{tpu_custom_call.1} parent=1 // pred_check_branch
      %68 = sbr.rel (0) target = $region77
    $region76: #{tpu_custom_call.1} parent=1 // pred_region
      _
    $region77: #{tpu_custom_call.1} parent=1 // pred_fallthru
      _
    // Predicated region
    $region78: #{tpu_custom_call.1} parent=1 // pred_check
      _
    $region79: #{tpu_custom_call.1} parent=1 // pred_check_branch
      %70 = sbr.rel (0) target = $region81
    $region80: #{tpu_custom_call.1} parent=1 // pred_region
      _
    $region81: #{tpu_custom_call.1} parent=1 // pred_fallthru
      _
    // Predicated region
    $region82: #{tpu_custom_call.1} parent=1 // pred_check
      _
    $region83: #{tpu_custom_call.1} parent=1 // pred_check_branch
      %72 = sbr.rel (0) target = $region85
    $region84: #{tpu_custom_call.1} parent=1 // pred_region
      _
    $region85: #{tpu_custom_call.1} parent=1 // pred_fallthru
      _
    // Predicated region
    $region86: #{tpu_custom_call.1} parent=1 // pred_check
      _
    $region87: #{tpu_custom_call.1} parent=1 // pred_check_branch
      %74 = sbr.rel (0) target = $region89
    $region88: #{tpu_custom_call.1} parent=1 // pred_region
      _
    $region89: #{tpu_custom_call.1} parent=1 // pred_fallthru
      _
    // Predicated region
    $region90: #{tpu_custom_call.1} parent=1 // pred_check
      _
    $region91: #{tpu_custom_call.1} parent=1 // pred_check_branch
      %76 = sbr.rel (0) target = $region93
    $region92: #{tpu_custom_call.1} parent=1 // pred_region
      _
    $region93: #{tpu_custom_call.1} parent=1 // pred_fallthru
      _
    // Predicated region
    $region94: #{tpu_custom_call.1} parent=1 // pred_check
      _
    $region95: #{tpu_custom_call.1} parent=1 // pred_check_branch
      %78 = sbr.rel (0) target = $region97
    $region96: #{tpu_custom_call.1} parent=1 // pred_region
      _
    $region97: #{tpu_custom_call.1} parent=1 // pred_fallthru
      _
    // Predicated region
    $region98: #{tpu_custom_call.1} parent=1 // pred_check
      _
    $region99: #{tpu_custom_call.1} parent=1 // pred_check_branch
      %80 = sbr.rel (0) target = $region101
    $region100: #{tpu_custom_call.1} parent=1 // pred_region
      _
    $region101: #{tpu_custom_call.1} parent=1 // pred_fallthru
      _
    %v82 = vld [vmem:[%s0] sm:$0xff]
    %v83 = vld [vmem:[%s0 + $0x8] sm:$0xff]
    %v84 = vld [vmem:[%s0 + $0x10] sm:$0xff]
    %v85 = vld [vmem:[%s0 + $0x18] sm:$0xff]
    %v86 = vld [vmem:[%s0 + $0x20] sm:$0xff]
    %v87 = vld [vmem:[%s0 + $0x28] sm:$0xff]
    %v88 = vld [vmem:[%s0 + $0x30] sm:$0xff]
    %v89 = vld [vmem:[%s0 + $0x38] sm:$0xff]
    %v90 = vpack.c.bf16 %v83, %v82
    %v91 = vpack.c.bf16 %v85, %v84
    %v92 = vpack.c.bf16 %v87, %v86
    %v93 = vpack.c.bf16 %v89, %v88
    %v94 = vld [vmem:[%s1] sm:$0xf]
    %v95 = vld [vmem:[%s2] sm:$0x1]
    %v97 = vlaneseq
    %v98 = vshrl.u32 %v97, 7
    %v99 = vsub.s32 0, %v98
    %v100 = vrot.slane %v95, %v99
    %vm102 = vcmask 64512
    %v104 = vsel %vm102, %v90, 0
    %v107 = vsel %vm102, %v91, 0
    %v110 = vsel %vm102, %v92, 0
    %v113 = vsel %vm102, %v93, 0
    %vm115 = vcmask 1043456
    %v117 = vsel %vm115, %v94, 0
    %119 = vmatprep.subr.bf16.mxu0 0
    %120 = vmatpush1.bf16.msra.mxu0 %v117
    %121 = vmatprep.subr.bf16.mxu0 0
    %122 = vmatpush1.bf16.msra.mxu0 0
    %123 = vmatprep.subr.bf16.mxu0 0
    %124 = vmatpush1.bf16.msra.mxu0 0
    %125 = vmatprep.subr.bf16.mxu0 0
    %126 = vmatpush1.bf16.msra.mxu0 0
    %127 = vmatprep.subr.bf16.mxu0 0
    %128 = vmatpush1.bf16.msra.mxu0 0
    %129 = vmatprep.subr.bf16.mxu0 0
    %130 = vmatpush1.bf16.msra.mxu0 0
    %131 = vmatprep.subr.bf16.mxu0 0
    %132 = vmatpush1.bf16.msra.mxu0 0
    %133 = vmatprep.subr.bf16.mxu0 0
    %134 = vmatpush1.bf16.msra.mxu0 0
    %135 = vmatprep.subr.bf16.mxu0 0
    %136 = vmatpush1.bf16.msra.mxu0 0
    %137 = vmatprep.subr.bf16.mxu0 0
    %138 = vmatpush1.bf16.msra.mxu0 0
    %139 = vmatprep.subr.bf16.mxu0 0
    %140 = vmatpush1.bf16.msra.mxu0 0
    %141 = vmatprep.subr.bf16.mxu0 0
    %142 = vmatpush1.bf16.msra.mxu0 0
    %143 = vmatprep.subr.bf16.mxu0 0
    %144 = vmatpush1.bf16.msra.mxu0 0
    %145 = vmatprep.subr.bf16.mxu0 0
    %146 = vmatpush1.bf16.msra.mxu0 0
    %147 = vmatprep.subr.bf16.mxu0 0
    %148 = vmatpush1.bf16.msra.mxu0 0
    %149 = vmatprep.subr.bf16.mxu0 0
    %150 = vmatpush1.bf16.msra.mxu0 0
    %151 = vmatprep.mubr.bf16.mxu0 0
    %152 = vmatmul.mubr.bf16.gmra.mrb[0].mxu0 %v104
    %v153 = vpop.f32.mrb[0].mxu0
    %v154 = vadd.f32 %v100, %v153
    %v155 = vpop.f32.mrb[0].mxu0
    %v156 = vpop.f32.mrb[0].mxu0
    %v157 = vadd.f32 %v100, %v156
    %v158 = vpop.f32.mrb[0].mxu0
    %159 = vmatprep.mubr.bf16.mxu0 0
    %160 = vmatmul.mubr.bf16.gmra.mrb[0].mxu0 %v107
    %v161 = vpop.f32.mrb[0].mxu0
    %v162 = vadd.f32 %v100, %v161
    %v163 = vpop.f32.mrb[0].mxu0
    %v164 = vpop.f32.mrb[0].mxu0
    %v165 = vadd.f32 %v100, %v164
    %v166 = vpop.f32.mrb[0].mxu0
    %167 = vmatprep.mubr.bf16.mxu0 0
    %168 = vmatmul.mubr.bf16.gmra.mrb[0].mxu0 %v110
    %v169 = vpop.f32.mrb[0].mxu0
    %v170 = vadd.f32 %v100, %v169
    %v171 = vpop.f32.mrb[0].mxu0
    %v172 = vpop.f32.mrb[0].mxu0
    %v173 = vadd.f32 %v100, %v172
    %v174 = vpop.f32.mrb[0].mxu0
    %175 = vmatprep.mubr.bf16.mxu0 0
    %176 = vmatmul.mubr.bf16.gmra.mrb[0].mxu0 %v113
    %v177 = vpop.f32.mrb[0].mxu0
    %v178 = vadd.f32 %v100, %v177
    %v179 = vpop.f32.mrb[0].mxu0
    %v180 = vpop.f32.mrb[0].mxu0
    %v181 = vadd.f32 %v100, %v180
    %v182 = vpop.f32.mrb[0].mxu0
    %183 = vdwg.mxu0
    %v184 = vsub.f32 0.0, %v154
    %v185 = vsub.f32 0.0, %v157
    %v186 = vsub.f32 0.0, %v162
    %v187 = vsub.f32 0.0, %v165
    %v188 = vsub.f32 0.0, %v170
    %v189 = vsub.f32 0.0, %v173
    %v190 = vsub.f32 0.0, %v178
    %v191 = vsub.f32 0.0, %v181
    %v192 = vmul.f32 %v184, 1.442695
    %v193 = vpow.pop %v192
    %v194 = vmul.f32 %v185, 1.442695
    %v195 = vpow.pop %v194
    %v196 = vmul.f32 %v186, 1.442695
    %v197 = vpow.pop %v196
    %v198 = vmul.f32 %v187, 1.442695
    %v199 = vpow.pop %v198
    %v200 = vmul.f32 %v188, 1.442695
    %v201 = vpow.pop %v200
    %v202 = vmul.f32 %v189, 1.442695
    %v203 = vpow.pop %v202
    %v204 = vmul.f32 %v190, 1.442695
    %v205 = vpow.pop %v204
    %v206 = vmul.f32 %v191, 1.442695
    %v207 = vpow.pop %v206
    %v208 = vadd.f32 %v193, 1.0
    %v209 = vadd.f32 %v195, 1.0
    %v210 = vadd.f32 %v197, 1.0
    %v211 = vadd.f32 %v199, 1.0
    %v212 = vadd.f32 %v201, 1.0
    %v213 = vadd.f32 %v203, 1.0
    %v214 = vadd.f32 %v205, 1.0
    %v215 = vadd.f32 %v207, 1.0
    %v216 = vrcp.pop %v208
    %v217 = vrcp.pop %v209
    %v218 = vrcp.pop %v210
    %v219 = vrcp.pop %v211
    %v220 = vrcp.pop %v212
    %v221 = vrcp.pop %v213
    %v222 = vrcp.pop %v214
    %v223 = vrcp.pop %v215
    %v224 = vmul.f32 %v154, %v216
    %v225 = vmul.f32 %v157, %v217
    %v226 = vmul.f32 %v162, %v218
    %v227 = vmul.f32 %v165, %v219
    %v228 = vmul.f32 %v170, %v220
    %v229 = vmul.f32 %v173, %v221
    %v230 = vmul.f32 %v178, %v222
    %v231 = vmul.f32 %v181, %v223
    %v232 = vld [vmem:[%s3] sm:$0x1]
    %v233 = vld [vmem:[%s4] sm:$0x1]
    %vm234 = vcmask 261120
    %v235 = vsel %vm234, %v224, 0.0
    %236 = vadd.xlane.f32.xlu0 %v235
    %v237 = vpop.xlane.xlu0 %236
    %v238 = vsel %vm234, %v225, 0.0
    %239 = vadd.xlane.f32.xlu0 %v238
    %v240 = vpop.xlane.xlu0 %239
    %v241 = vsel %vm234, %v226, 0.0
    %242 = vadd.xlane.f32.xlu0 %v241
    %v243 = vpop.xlane.xlu0 %242
    %v244 = vsel %vm234, %v227, 0.0
    %245 = vadd.xlane.f32.xlu0 %v244
    %v246 = vpop.xlane.xlu0 %245
    %v247 = vsel %vm234, %v228, 0.0
    %248 = vadd.xlane.f32.xlu0 %v247
    %v249 = vpop.xlane.xlu0 %248
    %v250 = vsel %vm234, %v229, 0.0
    %251 = vadd.xlane.f32.xlu0 %v250
    %v252 = vpop.xlane.xlu0 %251
    %v253 = vsel %vm234, %v230, 0.0
    %254 = vadd.xlane.f32.xlu0 %v253
    %v255 = vpop.xlane.xlu0 %254
    %v256 = vsel %vm234, %v231, 0.0
    %257 = vadd.xlane.f32.xlu0 %v256
    %v258 = vpop.xlane.xlu0 %257
    %v259 = vrcp.pop 32.0
    %v260 = vmul.f32 %v237, %v259
    %v261 = vmul.f32 %v240, %v259
    %v262 = vmul.f32 %v243, %v259
    %v263 = vmul.f32 %v246, %v259
    %v264 = vmul.f32 %v249, %v259
    %v265 = vmul.f32 %v252, %v259
    %v266 = vmul.f32 %v255, %v259
    %v267 = vmul.f32 %v258, %v259
    %v268 = vsub.f32 %v224, %v260
    %v269 = vsub.f32 %v225, %v261
    %v270 = vsub.f32 %v226, %v262
    %v271 = vsub.f32 %v227, %v263
    %v272 = vsub.f32 %v228, %v264
    %v273 = vsub.f32 %v229, %v265
    %v274 = vsub.f32 %v230, %v266
    %v275 = vsub.f32 %v231, %v267
    %v276 = vmul.f32 %v268, %v268
    %v277 = vmul.f32 %v269, %v269
    %v278 = vmul.f32 %v270, %v270
    %v279 = vmul.f32 %v271, %v271
    %v280 = vmul.f32 %v272, %v272
    %v281 = vmul.f32 %v273, %v273
    %v282 = vmul.f32 %v274, %v274
    %v283 = vmul.f32 %v275, %v275
    %v284 = vsel %vm234, %v276, 0.0
    %285 = vadd.xlane.f32.xlu0 %v284
    %v286 = vpop.xlane.xlu0 %285
    %v287 = vsel %vm234, %v277, 0.0
    %288 = vadd.xlane.f32.xlu0 %v287
    %v289 = vpop.xlane.xlu0 %288
    %v290 = vsel %vm234, %v278, 0.0
    %291 = vadd.xlane.f32.xlu0 %v290
    %v292 = vpop.xlane.xlu0 %291
    %v293 = vsel %vm234, %v279, 0.0
    %294 = vadd.xlane.f32.xlu0 %v293
    %v295 = vpop.xlane.xlu0 %294
    %v296 = vsel %vm234, %v280, 0.0
    %297 = vadd.xlane.f32.xlu0 %v296
    %v298 = vpop.xlane.xlu0 %297
    %v299 = vsel %vm234, %v281, 0.0
    %300 = vadd.xlane.f32.xlu0 %v299
    %v301 = vpop.xlane.xlu0 %300
    %v302 = vsel %vm234, %v282, 0.0
    %303 = vadd.xlane.f32.xlu0 %v302
    %v304 = vpop.xlane.xlu0 %303
    %v305 = vsel %vm234, %v283, 0.0
    %306 = vadd.xlane.f32.xlu0 %v305
    %v307 = vpop.xlane.xlu0 %306
    %v308 = vmul.f32 %v286, %v259
    %v309 = vmul.f32 %v289, %v259
    %v310 = vmul.f32 %v292, %v259
    %v311 = vmul.f32 %v295, %v259
    %v312 = vmul.f32 %v298, %v259
    %v313 = vmul.f32 %v301, %v259
    %v314 = vmul.f32 %v304, %v259
    %v315 = vmul.f32 %v307, %v259
    %v316 = vadd.f32 %v308, 0.1
    %v317 = vadd.f32 %v309, 0.1
    %v318 = vadd.f32 %v310, 0.1
    %v319 = vadd.f32 %v311, 0.1
    %v320 = vadd.f32 %v312, 0.1
    %v321 = vadd.f32 %v313, 0.1
    %v322 = vadd.f32 %v314, 0.1
    %v323 = vadd.f32 %v315, 0.1
    %v324 = vrsqrt.pop %v316
    %v325 = vrsqrt.pop %v317
    %v326 = vrsqrt.pop %v318
    %v327 = vrsqrt.pop %v319
    %v328 = vrsqrt.pop %v320
    %v329 = vrsqrt.pop %v321
    %v330 = vrsqrt.pop %v322
    %v331 = vrsqrt.pop %v323
    %v332 = vmul.f32 %v268, %v324
    %v333 = vmul.f32 %v269, %v325
    %v334 = vmul.f32 %v270, %v326
    %v335 = vmul.f32 %v271, %v327
    %v336 = vmul.f32 %v272, %v328
    %v337 = vmul.f32 %v273, %v329
    %v338 = vmul.f32 %v274, %v330
    %v339 = vmul.f32 %v275, %v331
    %v341 = vlaneseq
    %v342 = vshrl.u32 %v341, 7
    %v343 = vsub.s32 0, %v342
    %v344 = vrot.slane %v232, %v343
    %v346 = vmul.f32 %v332, %v344
    %v347 = vmul.f32 %v333, %v344
    %v348 = vmul.f32 %v334, %v344
    %v349 = vmul.f32 %v335, %v344
    %v350 = vmul.f32 %v336, %v344
    %v351 = vmul.f32 %v337, %v344
    %v352 = vmul.f32 %v338, %v344
    %v353 = vmul.f32 %v339, %v344
    %v355 = vlaneseq
    %v356 = vshrl.u32 %v355, 7
    %v357 = vsub.s32 0, %v356
    %v358 = vrot.slane %v233, %v357
    %v360 = vadd.f32 %v346, %v358
    %v361 = vadd.f32 %v347, %v358
    %v362 = vadd.f32 %v348, %v358
    %v363 = vadd.f32 %v349, %v358
    %v364 = vadd.f32 %v350, %v358
    %v365 = vadd.f32 %v351, %v358
    %v366 = vadd.f32 %v352, %v358
    %v367 = vadd.f32 %v353, %v358
    %v368 = vpack.c.bf16 %v361, %v360
    %v369 = vpack.c.bf16 %v363, %v362
    %v370 = vpack.c.bf16 %v365, %v364
    %v371 = vpack.c.bf16 %v367, %v366
    %v372 = vld [vmem:[%s5] sm:$0xf]
    %v373 = vld [vmem:[%s5 + $0x4] sm:$0xf]
    %v374 = vld [vmem:[%s5 + $0x8] sm:$0xf]
    %v375 = vld [vmem:[%s5 + $0xc] sm:$0xf]
    %v376 = vld [vmem:[%s6] sm:$0x1]
    %v378 = vlaneseq
    %v379 = vshrl.u32 %v378, 7
    %v380 = vsub.s32 0, %v379
    %v381 = vrot.slane %v376, %v380
    %v387 = vunpack.c.l.b16 %v372
    %v388 = vunpack.c.l.b16 %v373
    %v389 = vunpack.c.l.b16 %v374
    %v390 = vunpack.c.l.b16 %v375
    %v391 = vpack.c.b16 %v388, %v387
    %v392 = vpack.c.b16 %v390, %v389
    %v396 = vsel %vm234, %v368, 0
    %v399 = vsel %vm234, %v369, 0
    %v402 = vsel %vm234, %v370, 0
    %v405 = vsel %vm234, %v371, 0
    %407 = vmatprep.subr.bf16.mxu0 0
    %408 = vmatpush1.bf16.msra.mxu0 %v391
    %409 = vmatprep.subr.bf16.mxu0 0
    %410 = vmatpush1.bf16.msra.mxu0 %v392
    %411 = vmatprep.subr.bf16.mxu0 0
    %412 = vmatpush1.bf16.msra.mxu0 0
    %413 = vmatprep.subr.bf16.mxu0 0
    %414 = vmatpush1.bf16.msra.mxu0 0
    %415 = vmatprep.subr.bf16.mxu0 0
    %416 = vmatpush1.bf16.msra.mxu0 0
    %417 = vmatprep.subr.bf16.mxu0 0
    %418 = vmatpush1.bf16.msra.mxu0 0
    %419 = vmatprep.subr.bf16.mxu0 0
    %420 = vmatpush1.bf16.msra.mxu0 0
    %421 = vmatprep.subr.bf16.mxu0 0
    %422 = vmatpush1.bf16.msra.mxu0 0
    %423 = vmatprep.subr.bf16.mxu0 0
    %424 = vmatpush1.bf16.msra.mxu0 0
    %425 = vmatprep.subr.bf16.mxu0 0
    %426 = vmatpush1.bf16.msra.mxu0 0
    %427 = vmatprep.subr.bf16.mxu0 0
    %428 = vmatpush1.bf16.msra.mxu0 0
    %429 = vmatprep.subr.bf16.mxu0 0
    %430 = vmatpush1.bf16.msra.mxu0 0
    %431 = vmatprep.subr.bf16.mxu0 0
    %432 = vmatpush1.bf16.msra.mxu0 0
    %433 = vmatprep.subr.bf16.mxu0 0
    %434 = vmatpush1.bf16.msra.mxu0 0
    %435 = vmatprep.subr.bf16.mxu0 0
    %436 = vmatpush1.bf16.msra.mxu0 0
    %437 = vmatprep.subr.bf16.mxu0 0
    %438 = vmatpush1.bf16.msra.mxu0 0
    %439 = vmatprep.mubr.bf16.mxu0 0
    %440 = vmatmul.mubr.bf16.gmra.mrb[0].mxu0 %v396
    %v441 = vpop.f32.mrb[0].mxu0
    %v442 = vadd.f32 %v381, %v441
    %v443 = vpop.f32.mrb[0].mxu0
    %v444 = vpop.f32.mrb[0].mxu0
    %v445 = vadd.f32 %v381, %v444
    %v446 = vpop.f32.mrb[0].mxu0
    %447 = vmatprep.mubr.bf16.mxu0 0
    %448 = vmatmul.mubr.bf16.gmra.mrb[0].mxu0 %v399
    %v449 = vpop.f32.mrb[0].mxu0
    %v450 = vadd.f32 %v381, %v449
    %v451 = vpop.f32.mrb[0].mxu0
    %v452 = vpop.f32.mrb[0].mxu0
    %v453 = vadd.f32 %v381, %v452
    %v454 = vpop.f32.mrb[0].mxu0
    %455 = vmatprep.mubr.bf16.mxu0 0
    %456 = vmatmul.mubr.bf16.gmra.mrb[0].mxu0 %v402
    %v457 = vpop.f32.mrb[0].mxu0
    %v458 = vadd.f32 %v381, %v457
    %v459 = vpop.f32.mrb[0].mxu0
    %v460 = vpop.f32.mrb[0].mxu0
    %v461 = vadd.f32 %v381, %v460
    %v462 = vpop.f32.mrb[0].mxu0
    %463 = vmatprep.mubr.bf16.mxu0 0
    %464 = vmatmul.mubr.bf16.gmra.mrb[0].mxu0 %v405
    %v465 = vpop.f32.mrb[0].mxu0
    %v466 = vadd.f32 %v381, %v465
    %v467 = vpop.f32.mrb[0].mxu0
    %v468 = vpop.f32.mrb[0].mxu0
    %v469 = vadd.f32 %v381, %v468
    %v470 = vpop.f32.mrb[0].mxu0
    %471 = vdwg.mxu0
    %v472 = vadd.f32 %v442, %v360
    %v473 = vadd.f32 %v445, %v361
    %v474 = vadd.f32 %v450, %v362
    %v475 = vadd.f32 %v453, %v363
    %v476 = vadd.f32 %v458, %v364
    %v477 = vadd.f32 %v461, %v365
    %v478 = vadd.f32 %v466, %v366
    %v479 = vadd.f32 %v469, %v367
    %v480 = vsub.f32 0.0, %v472
    %v481 = vsub.f32 0.0, %v473
    %v482 = vsub.f32 0.0, %v474
    %v483 = vsub.f32 0.0, %v475
    %v484 = vsub.f32 0.0, %v476
    %v485 = vsub.f32 0.0, %v477
    %v486 = vsub.f32 0.0, %v478
    %v487 = vsub.f32 0.0, %v479
    %v488 = vmul.f32 %v480, 1.442695
    %v489 = vpow.pop %v488
    %v490 = vmul.f32 %v481, 1.442695
    %v491 = vpow.pop %v490
    %v492 = vmul.f32 %v482, 1.442695
    %v493 = vpow.pop %v492
    %v494 = vmul.f32 %v483, 1.442695
    %v495 = vpow.pop %v494
    %v496 = vmul.f32 %v484, 1.442695
    %v497 = vpow.pop %v496
    %v498 = vmul.f32 %v485, 1.442695
    %v499 = vpow.pop %v498
    %v500 = vmul.f32 %v486, 1.442695
    %v501 = vpow.pop %v500
    %v502 = vmul.f32 %v487, 1.442695
    %v503 = vpow.pop %v502
    %v504 = vadd.f32 %v489, 1.0
    %v505 = vadd.f32 %v491, 1.0
    %v506 = vadd.f32 %v493, 1.0
    %v507 = vadd.f32 %v495, 1.0
    %v508 = vadd.f32 %v497, 1.0
    %v509 = vadd.f32 %v499, 1.0
    %v510 = vadd.f32 %v501, 1.0
    %v511 = vadd.f32 %v503, 1.0
    %v512 = vrcp.pop %v504
    %v513 = vrcp.pop %v505
    %v514 = vrcp.pop %v506
    %v515 = vrcp.pop %v507
    %v516 = vrcp.pop %v508
    %v517 = vrcp.pop %v509
    %v518 = vrcp.pop %v510
    %v519 = vrcp.pop %v511
    %v520 = vmul.f32 %v472, %v512
    %v521 = vmul.f32 %v473, %v513
    %v522 = vmul.f32 %v474, %v514
    %v523 = vmul.f32 %v475, %v515
    %v524 = vmul.f32 %v476, %v516
    %v525 = vmul.f32 %v477, %v517
    %v526 = vmul.f32 %v478, %v518
    %v527 = vmul.f32 %v479, %v519
    %v528 = vld [vmem:[%s7] sm:$0x1]
    %v529 = vld [vmem:[%s8] sm:$0x1]
    %v530 = vsel %vm234, %v520, 0.0
    %531 = vadd.xlane.f32.xlu0 %v530
    %v532 = vpop.xlane.xlu0 %531
    %v533 = vsel %vm234, %v521, 0.0
    %534 = vadd.xlane.f32.xlu0 %v533
    %v535 = vpop.xlane.xlu0 %534
    %v536 = vsel %vm234, %v522, 0.0
    %537 = vadd.xlane.f32.xlu0 %v536
    %v538 = vpop.xlane.xlu0 %537
    %v539 = vsel %vm234, %v523, 0.0
    %540 = vadd.xlane.f32.xlu0 %v539
    %v541 = vpop.xlane.xlu0 %540
    %v542 = vsel %vm234, %v524, 0.0
    %543 = vadd.xlane.f32.xlu0 %v542
    %v544 = vpop.xlane.xlu0 %543
    %v545 = vsel %vm234, %v525, 0.0
    %546 = vadd.xlane.f32.xlu0 %v545
    %v547 = vpop.xlane.xlu0 %546
    %v548 = vsel %vm234, %v526, 0.0
    %549 = vadd.xlane.f32.xlu0 %v548
    %v550 = vpop.xlane.xlu0 %549
    %v551 = vsel %vm234, %v527, 0.0
    %552 = vadd.xlane.f32.xlu0 %v551
    %v553 = vpop.xlane.xlu0 %552
    %v554 = vmul.f32 %v532, %v259
    %v555 = vmul.f32 %v535, %v259
    %v556 = vmul.f32 %v538, %v259
    %v557 = vmul.f32 %v541, %v259
    %v558 = vmul.f32 %v544, %v259
    %v559 = vmul.f32 %v547, %v259
    %v560 = vmul.f32 %v550, %v259
    %v561 = vmul.f32 %v553, %v259
    %v562 = vsub.f32 %v520, %v554
    %v563 = vsub.f32 %v521, %v555
    %v564 = vsub.f32 %v522, %v556
    %v565 = vsub.f32 %v523, %v557
    %v566 = vsub.f32 %v524, %v558
    %v567 = vsub.f32 %v525, %v559
    %v568 = vsub.f32 %v526, %v560
    %v569 = vsub.f32 %v527, %v561
    %v570 = vmul.f32 %v562, %v562
    %v571 = vmul.f32 %v563, %v563
    %v572 = vmul.f32 %v564, %v564
    %v573 = vmul.f32 %v565, %v565
    %v574 = vmul.f32 %v566, %v566
    %v575 = vmul.f32 %v567, %v567
    %v576 = vmul.f32 %v568, %v568
    %v577 = vmul.f32 %v569, %v569
    %v578 = vsel %vm234, %v570, 0.0
    %579 = vadd.xlane.f32.xlu0 %v578
    %v580 = vpop.xlane.xlu0 %579
    %v581 = vsel %vm234, %v571, 0.0
    %582 = vadd.xlane.f32.xlu0 %v581
    %v583 = vpop.xlane.xlu0 %582
    %v584 = vsel %vm234, %v572, 0.0
    %585 = vadd.xlane.f32.xlu0 %v584
    %v586 = vpop.xlane.xlu0 %585
    %v587 = vsel %vm234, %v573, 0.0
    %588 = vadd.xlane.f32.xlu0 %v587
    %v589 = vpop.xlane.xlu0 %588
    %v590 = vsel %vm234, %v574, 0.0
    %591 = vadd.xlane.f32.xlu0 %v590
    %v592 = vpop.xlane.xlu0 %591
    %v593 = vsel %vm234, %v575, 0.0
    %594 = vadd.xlane.f32.xlu0 %v593
    %v595 = vpop.xlane.xlu0 %594
    %v596 = vsel %vm234, %v576, 0.0
    %597 = vadd.xlane.f32.xlu0 %v596
    %v598 = vpop.xlane.xlu0 %597
    %v599 = vsel %vm234, %v577, 0.0
    %600 = vadd.xlane.f32.xlu0 %v599
    %v601 = vpop.xlane.xlu0 %600
    %v602 = vmul.f32 %v580, %v259
    %v603 = vmul.f32 %v583, %v259
    %v604 = vmul.f32 %v586, %v259
    %v605 = vmul.f32 %v589, %v259
    %v606 = vmul.f32 %v592, %v259
    %v607 = vmul.f32 %v595, %v259
    %v608 = vmul.f32 %v598, %v259
    %v609 = vmul.f32 %v601, %v259
    %v610 = vadd.f32 %v602, 0.1
    %v611 = vadd.f32 %v603, 0.1
    %v612 = vadd.f32 %v604, 0.1
    %v613 = vadd.f32 %v605, 0.1
    %v614 = vadd.f32 %v606, 0.1
    %v615 = vadd.f32 %v607, 0.1
    %v616 = vadd.f32 %v608, 0.1
    %v617 = vadd.f32 %v609, 0.1
    %v618 = vrsqrt.pop %v610
    %v619 = vrsqrt.pop %v611
    %v620 = vrsqrt.pop %v612
    %v621 = vrsqrt.pop %v613
    %v622 = vrsqrt.pop %v614
    %v623 = vrsqrt.pop %v615
    %v624 = vrsqrt.pop %v616
    %v625 = vrsqrt.pop %v617
    %v626 = vmul.f32 %v562, %v618
    %v627 = vmul.f32 %v563, %v619
    %v628 = vmul.f32 %v564, %v620
    %v629 = vmul.f32 %v565, %v621
    %v630 = vmul.f32 %v566, %v622
    %v631 = vmul.f32 %v567, %v623
    %v632 = vmul.f32 %v568, %v624
    %v633 = vmul.f32 %v569, %v625
    %v635 = vlaneseq
    %v636 = vshrl.u32 %v635, 7
    %v637 = vsub.s32 0, %v636
    %v638 = vrot.slane %v528, %v637
    %v640 = vmul.f32 %v626, %v638
    %v641 = vmul.f32 %v627, %v638
    %v642 = vmul.f32 %v628, %v638
    %v643 = vmul.f32 %v629, %v638
    %v644 = vmul.f32 %v630, %v638
    %v645 = vmul.f32 %v631, %v638
    %v646 = vmul.f32 %v632, %v638
    %v647 = vmul.f32 %v633, %v638
    %v649 = vlaneseq
    %v650 = vshrl.u32 %v649, 7
    %v651 = vsub.s32 0, %v650
    %v652 = vrot.slane %v529, %v651
    %v654 = vadd.f32 %v640, %v652
    %v655 = vadd.f32 %v641, %v652
    %v656 = vadd.f32 %v642, %v652
    %v657 = vadd.f32 %v643, %v652
    %v658 = vadd.f32 %v644, %v652
    %v659 = vadd.f32 %v645, %v652
    %v660 = vadd.f32 %v646, %v652
    %v661 = vadd.f32 %v647, %v652
    %v662 = vadd.f32 %v360, %v654
    %v663 = vadd.f32 %v361, %v655
    %v664 = vadd.f32 %v362, %v656
    %v665 = vadd.f32 %v363, %v657
    %v666 = vadd.f32 %v364, %v658
    %v667 = vadd.f32 %v365, %v659
    %v668 = vadd.f32 %v366, %v660
    %v669 = vadd.f32 %v367, %v661
    %v670 = vpack.c.bf16 %v655, %v654
    %v671 = vpack.c.bf16 %v657, %v656
    %v672 = vpack.c.bf16 %v659, %v658
    %v673 = vpack.c.bf16 %v661, %v660
    %v674 = vld [vmem:[%s9] sm:$0xf]
    %v675 = vld [vmem:[%s9 + $0x4] sm:$0xf]
    %v676 = vld [vmem:[%s9 + $0x8] sm:$0xf]
    %v677 = vld [vmem:[%s9 + $0xc] sm:$0xf]
    %v678 = vld [vmem:[%s10] sm:$0x1]
    %v680 = vlaneseq
    %v681 = vshrl.u32 %v680, 7
    %v682 = vsub.s32 0, %v681
    %v683 = vrot.slane %v678, %v682
    %v689 = vunpack.c.l.b16 %v674
    %v690 = vunpack.c.l.b16 %v675
    %v691 = vunpack.c.l.b16 %v676
    %v692 = vunpack.c.l.b16 %v677
    %v693 = vpack.c.b16 %v690, %v689
    %v694 = vpack.c.b16 %v692, %v691
    %v698 = vsel %vm234, %v670, 0
    %v701 = vsel %vm234, %v671, 0
    %v704 = vsel %vm234, %v672, 0
    %v707 = vsel %vm234, %v673, 0
    %709 = vmatprep.subr.bf16.mxu0 0
    %710 = vmatpush1.bf16.msra.mxu0 %v693
    %711 = vmatprep.subr.bf16.mxu0 0
    %712 = vmatpush1.bf16.msra.mxu0 %v694
    %713 = vmatprep.subr.bf16.mxu0 0
    %714 = vmatpush1.bf16.msra.mxu0 0
    %715 = vmatprep.subr.bf16.mxu0 0
    %716 = vmatpush1.bf16.msra.mxu0 0
    %717 = vmatprep.subr.bf16.mxu0 0
    %718 = vmatpush1.bf16.msra.mxu0 0
    %719 = vmatprep.subr.bf16.mxu0 0
    %720 = vmatpush1.bf16.msra.mxu0 0
    %721 = vmatprep.subr.bf16.mxu0 0
    %722 = vmatpush1.bf16.msra.mxu0 0
    %723 = vmatprep.subr.bf16.mxu0 0
    %724 = vmatpush1.bf16.msra.mxu0 0
    %725 = vmatprep.subr.bf16.mxu0 0
    %726 = vmatpush1.bf16.msra.mxu0 0
    %727 = vmatprep.subr.bf16.mxu0 0
    %728 = vmatpush1.bf16.msra.mxu0 0
    %729 = vmatprep.subr.bf16.mxu0 0
    %730 = vmatpush1.bf16.msra.mxu0 0
    %731 = vmatprep.subr.bf16.mxu0 0
    %732 = vmatpush1.bf16.msra.mxu0 0
    %733 = vmatprep.subr.bf16.mxu0 0
    %734 = vmatpush1.bf16.msra.mxu0 0
    %735 = vmatprep.subr.bf16.mxu0 0
    %736 = vmatpush1.bf16.msra.mxu0 0
    %737 = vmatprep.subr.bf16.mxu0 0
    %738 = vmatpush1.bf16.msra.mxu0 0
    %739 = vmatprep.subr.bf16.mxu0 0
    %740 = vmatpush1.bf16.msra.mxu0 0
    %741 = vmatprep.mubr.bf16.mxu0 0
    %742 = vmatmul.mubr.bf16.gmra.mrb[0].mxu0 %v698
    %v743 = vpop.f32.mrb[0].mxu0
    %v744 = vadd.f32 %v683, %v743
    %v745 = vpop.f32.mrb[0].mxu0
    %v746 = vpop.f32.mrb[0].mxu0
    %v747 = vadd.f32 %v683, %v746
    %v748 = vpop.f32.mrb[0].mxu0
    %749 = vmatprep.mubr.bf16.mxu0 0
    %750 = vmatmul.mubr.bf16.gmra.mrb[0].mxu0 %v701
    %v751 = vpop.f32.mrb[0].mxu0
    %v752 = vadd.f32 %v683, %v751
    %v753 = vpop.f32.mrb[0].mxu0
    %v754 = vpop.f32.mrb[0].mxu0
    %v755 = vadd.f32 %v683, %v754
    %v756 = vpop.f32.mrb[0].mxu0
    %757 = vmatprep.mubr.bf16.mxu0 0
    %758 = vmatmul.mubr.bf16.gmra.mrb[0].mxu0 %v704
    %v759 = vpop.f32.mrb[0].mxu0
    %v760 = vadd.f32 %v683, %v759
    %v761 = vpop.f32.mrb[0].mxu0
    %v762 = vpop.f32.mrb[0].mxu0
    %v763 = vadd.f32 %v683, %v762
    %v764 = vpop.f32.mrb[0].mxu0
    %765 = vmatprep.mubr.bf16.mxu0 0
    %766 = vmatmul.mubr.bf16.gmra.mrb[0].mxu0 %v707
    %v767 = vpop.f32.mrb[0].mxu0
    %v768 = vadd.f32 %v683, %v767
    %v769 = vpop.f32.mrb[0].mxu0
    %v770 = vpop.f32.mrb[0].mxu0
    %v771 = vadd.f32 %v683, %v770
    %v772 = vpop.f32.mrb[0].mxu0
    %773 = vdwg.mxu0
    %v774 = vadd.f32 %v744, %v662
    %v775 = vadd.f32 %v747, %v663
    %v776 = vadd.f32 %v752, %v664
    %v777 = vadd.f32 %v755, %v665
    %v778 = vadd.f32 %v760, %v666
    %v779 = vadd.f32 %v763, %v667
    %v780 = vadd.f32 %v768, %v668
    %v781 = vadd.f32 %v771, %v669
    %v782 = vsub.f32 0.0, %v774
    %v783 = vsub.f32 0.0, %v775
    %v784 = vsub.f32 0.0, %v776
    %v785 = vsub.f32 0.0, %v777
    %v786 = vsub.f32 0.0, %v778
    %v787 = vsub.f32 0.0, %v779
    %v788 = vsub.f32 0.0, %v780
    %v789 = vsub.f32 0.0, %v781
    %v790 = vmul.f32 %v782, 1.442695
    %v791 = vpow.pop %v790
    %v792 = vmul.f32 %v783, 1.442695
    %v793 = vpow.pop %v792
    %v794 = vmul.f32 %v784, 1.442695
    %v795 = vpow.pop %v794
    %v796 = vmul.f32 %v785, 1.442695
    %v797 = vpow.pop %v796
    %v798 = vmul.f32 %v786, 1.442695
    %v799 = vpow.pop %v798
    %v800 = vmul.f32 %v787, 1.442695
    %v801 = vpow.pop %v800
    %v802 = vmul.f32 %v788, 1.442695
    %v803 = vpow.pop %v802
    %v804 = vmul.f32 %v789, 1.442695
    %v805 = vpow.pop %v804
    %v806 = vadd.f32 %v791, 1.0
    %v807 = vadd.f32 %v793, 1.0
    %v808 = vadd.f32 %v795, 1.0
    %v809 = vadd.f32 %v797, 1.0
    %v810 = vadd.f32 %v799, 1.0
    %v811 = vadd.f32 %v801, 1.0
    %v812 = vadd.f32 %v803, 1.0
    %v813 = vadd.f32 %v805, 1.0
    %v814 = vrcp.pop %v806
    %v815 = vrcp.pop %v807
    %v816 = vrcp.pop %v808
    %v817 = vrcp.pop %v809
    %v818 = vrcp.pop %v810
    %v819 = vrcp.pop %v811
    %v820 = vrcp.pop %v812
    %v821 = vrcp.pop %v813
    %v822 = vmul.f32 %v774, %v814
    %v823 = vmul.f32 %v775, %v815
    %v824 = vmul.f32 %v776, %v816
    %v825 = vmul.f32 %v777, %v817
    %v826 = vmul.f32 %v778, %v818
    %v827 = vmul.f32 %v779, %v819
    %v828 = vmul.f32 %v780, %v820
    %v829 = vmul.f32 %v781, %v821
    %v830 = vld [vmem:[%s11] sm:$0x1]
    %v831 = vld [vmem:[%s12] sm:$0x1]
    %v832 = vsel %vm234, %v822, 0.0
    %833 = vadd.xlane.f32.xlu0 %v832
    %v834 = vpop.xlane.xlu0 %833
    %v835 = vsel %vm234, %v823, 0.0
    %836 = vadd.xlane.f32.xlu0 %v835
    %v837 = vpop.xlane.xlu0 %836
    %v838 = vsel %vm234, %v824, 0.0
    %839 = vadd.xlane.f32.xlu0 %v838
    %v840 = vpop.xlane.xlu0 %839
    %v841 = vsel %vm234, %v825, 0.0
    %842 = vadd.xlane.f32.xlu0 %v841
    %v843 = vpop.xlane.xlu0 %842
    %v844 = vsel %vm234, %v826, 0.0
    %845 = vadd.xlane.f32.xlu0 %v844
    %v846 = vpop.xlane.xlu0 %845
    %v847 = vsel %vm234, %v827, 0.0
    %848 = vadd.xlane.f32.xlu0 %v847
    %v849 = vpop.xlane.xlu0 %848
    %v850 = vsel %vm234, %v828, 0.0
    %851 = vadd.xlane.f32.xlu0 %v850
    %v852 = vpop.xlane.xlu0 %851
    %v853 = vsel %vm234, %v829, 0.0
    %854 = vadd.xlane.f32.xlu0 %v853
    %v855 = vpop.xlane.xlu0 %854
    %v856 = vmul.f32 %v834, %v259
    %v857 = vmul.f32 %v837, %v259
    %v858 = vmul.f32 %v840, %v259
    %v859 = vmul.f32 %v843, %v259
    %v860 = vmul.f32 %v846, %v259
    %v861 = vmul.f32 %v849, %v259
    %v862 = vmul.f32 %v852, %v259
    %v863 = vmul.f32 %v855, %v259
    %v864 = vsub.f32 %v822, %v856
    %v865 = vsub.f32 %v823, %v857
    %v866 = vsub.f32 %v824, %v858
    %v867 = vsub.f32 %v825, %v859
    %v868 = vsub.f32 %v826, %v860
    %v869 = vsub.f32 %v827, %v861
    %v870 = vsub.f32 %v828, %v862
    %v871 = vsub.f32 %v829, %v863
    %v872 = vmul.f32 %v864, %v864
    %v873 = vmul.f32 %v865, %v865
    %v874 = vmul.f32 %v866, %v866
    %v875 = vmul.f32 %v867, %v867
    %v876 = vmul.f32 %v868, %v868
    %v877 = vmul.f32 %v869, %v869
    %v878 = vmul.f32 %v870, %v870
    %v879 = vmul.f32 %v871, %v871
    %v880 = vsel %vm234, %v872, 0.0
    %881 = vadd.xlane.f32.xlu0 %v880
    %v882 = vpop.xlane.xlu0 %881
    %v883 = vsel %vm234, %v873, 0.0
    %884 = vadd.xlane.f32.xlu0 %v883
    %v885 = vpop.xlane.xlu0 %884
    %v886 = vsel %vm234, %v874, 0.0
    %887 = vadd.xlane.f32.xlu0 %v886
    %v888 = vpop.xlane.xlu0 %887
    %v889 = vsel %vm234, %v875, 0.0
    %890 = vadd.xlane.f32.xlu0 %v889
    %v891 = vpop.xlane.xlu0 %890
    %v892 = vsel %vm234, %v876, 0.0
    %893 = vadd.xlane.f32.xlu0 %v892
    %v894 = vpop.xlane.xlu0 %893
    %v895 = vsel %vm234, %v877, 0.0
    %896 = vadd.xlane.f32.xlu0 %v895
    %v897 = vpop.xlane.xlu0 %896
    %v898 = vsel %vm234, %v878, 0.0
    %899 = vadd.xlane.f32.xlu0 %v898
    %v900 = vpop.xlane.xlu0 %899
    %v901 = vsel %vm234, %v879, 0.0
    %902 = vadd.xlane.f32.xlu0 %v901
    %v903 = vpop.xlane.xlu0 %902
    %v904 = vmul.f32 %v882, %v259
    %v905 = vmul.f32 %v885, %v259
    %v906 = vmul.f32 %v888, %v259
    %v907 = vmul.f32 %v891, %v259
    %v908 = vmul.f32 %v894, %v259
    %v909 = vmul.f32 %v897, %v259
    %v910 = vmul.f32 %v900, %v259
    %v911 = vmul.f32 %v903, %v259
    %v912 = vadd.f32 %v904, 0.1
    %v913 = vadd.f32 %v905, 0.1
    %v914 = vadd.f32 %v906, 0.1
    %v915 = vadd.f32 %v907, 0.1
    %v916 = vadd.f32 %v908, 0.1
    %v917 = vadd.f32 %v909, 0.1
    %v918 = vadd.f32 %v910, 0.1
    %v919 = vadd.f32 %v911, 0.1
    %v920 = vrsqrt.pop %v912
    %v921 = vrsqrt.pop %v913
    %v922 = vrsqrt.pop %v914
    %v923 = vrsqrt.pop %v915
    %v924 = vrsqrt.pop %v916
    %v925 = vrsqrt.pop %v917
    %v926 = vrsqrt.pop %v918
    %v927 = vrsqrt.pop %v919
    %v928 = vmul.f32 %v864, %v920
    %v929 = vmul.f32 %v865, %v921
    %v930 = vmul.f32 %v866, %v922
    %v931 = vmul.f32 %v867, %v923
    %v932 = vmul.f32 %v868, %v924
    %v933 = vmul.f32 %v869, %v925
    %v934 = vmul.f32 %v870, %v926
    %v935 = vmul.f32 %v871, %v927
    %v937 = vlaneseq
    %v938 = vshrl.u32 %v937, 7
    %v939 = vsub.s32 0, %v938
    %v940 = vrot.slane %v830, %v939
    %v942 = vmul.f32 %v928, %v940
    %v943 = vmul.f32 %v929, %v940
    %v944 = vmul.f32 %v930, %v940
    %v945 = vmul.f32 %v931, %v940
    %v946 = vmul.f32 %v932, %v940
    %v947 = vmul.f32 %v933, %v940
    %v948 = vmul.f32 %v934, %v940
    %v949 = vmul.f32 %v935, %v940
    %v951 = vlaneseq
    %v952 = vshrl.u32 %v951, 7
    %v953 = vsub.s32 0, %v952
    %v954 = vrot.slane %v831, %v953
    %v956 = vadd.f32 %v942, %v954
    %v957 = vadd.f32 %v943, %v954
    %v958 = vadd.f32 %v944, %v954
    %v959 = vadd.f32 %v945, %v954
    %v960 = vadd.f32 %v946, %v954
    %v961 = vadd.f32 %v947, %v954
    %v962 = vadd.f32 %v948, %v954
    %v963 = vadd.f32 %v949, %v954
    %v964 = vadd.f32 %v662, %v956
    %v965 = vadd.f32 %v663, %v957
    %v966 = vadd.f32 %v664, %v958
    %v967 = vadd.f32 %v665, %v959
    %v968 = vadd.f32 %v666, %v960
    %v969 = vadd.f32 %v667, %v961
    %v970 = vadd.f32 %v668, %v962
    %v971 = vadd.f32 %v669, %v963
    %v972 = vpack.c.bf16 %v957, %v956
    %v973 = vpack.c.bf16 %v959, %v958
    %v974 = vpack.c.bf16 %v961, %v960
    %v975 = vpack.c.bf16 %v963, %v962
    %v976 = vld [vmem:[%s13] sm:$0xf]
    %v977 = vld [vmem:[%s13 + $0x4] sm:$0xf]
    %v978 = vld [vmem:[%s13 + $0x8] sm:$0xf]
    %v979 = vld [vmem:[%s13 + $0xc] sm:$0xf]
    %v980 = vld [vmem:[%s14] sm:$0x1]
    %v982 = vlaneseq
    %v983 = vshrl.u32 %v982, 7
    %v984 = vsub.s32 0, %v983
    %v985 = vrot.slane %v980, %v984
    %v991 = vunpack.c.l.b16 %v976
    %v992 = vunpack.c.l.b16 %v977
    %v993 = vunpack.c.l.b16 %v978
    %v994 = vunpack.c.l.b16 %v979
    %v995 = vpack.c.b16 %v992, %v991
    %v996 = vpack.c.b16 %v994, %v993
    %v1000 = vsel %vm234, %v972, 0
    %v1003 = vsel %vm234, %v973, 0
    %v1006 = vsel %vm234, %v974, 0
    %v1009 = vsel %vm234, %v975, 0
    %1011 = vmatprep.subr.bf16.mxu0 0
    %1012 = vmatpush1.bf16.msra.mxu0 %v995
    %1013 = vmatprep.subr.bf16.mxu0 0
    %1014 = vmatpush1.bf16.msra.mxu0 %v996
    %1015 = vmatprep.subr.bf16.mxu0 0
    %1016 = vmatpush1.bf16.msra.mxu0 0
    %1017 = vmatprep.subr.bf16.mxu0 0
    %1018 = vmatpush1.bf16.msra.mxu0 0
    %1019 = vmatprep.subr.bf16.mxu0 0
    %1020 = vmatpush1.bf16.msra.mxu0 0
    %1021 = vmatprep.subr.bf16.mxu0 0
    %1022 = vmatpush1.bf16.msra.mxu0 0
    %1023 = vmatprep.subr.bf16.mxu0 0
    %1024 = vmatpush1.bf16.msra.mxu0 0
    %1025 = vmatprep.subr.bf16.mxu0 0
    %1026 = vmatpush1.bf16.msra.mxu0 0
    %1027 = vmatprep.subr.bf16.mxu0 0
    %1028 = vmatpush1.bf16.msra.mxu0 0
    %1029 = vmatprep.subr.bf16.mxu0 0
    %1030 = vmatpush1.bf16.msra.mxu0 0
    %1031 = vmatprep.subr.bf16.mxu0 0
    %1032 = vmatpush1.bf16.msra.mxu0 0
    %1033 = vmatprep.subr.bf16.mxu0 0
    %1034 = vmatpush1.bf16.msra.mxu0 0
    %1035 = vmatprep.subr.bf16.mxu0 0
    %1036 = vmatpush1.bf16.msra.mxu0 0
    %1037 = vmatprep.subr.bf16.mxu0 0
    %1038 = vmatpush1.bf16.msra.mxu0 0
    %1039 = vmatprep.subr.bf16.mxu0 0
    %1040 = vmatpush1.bf16.msra.mxu0 0
    %1041 = vmatprep.subr.bf16.mxu0 0
    %1042 = vmatpush1.bf16.msra.mxu0 0
    %1043 = vmatprep.mubr.bf16.mxu0 0
    %1044 = vmatmul.mubr.bf16.gmra.mrb[0].mxu0 %v1000
    %v1045 = vpop.f32.mrb[0].mxu0
    %v1046 = vadd.f32 %v985, %v1045
    %v1047 = vpop.f32.mrb[0].mxu0
    %v1048 = vpop.f32.mrb[0].mxu0
    %v1049 = vadd.f32 %v985, %v1048
    %v1050 = vpop.f32.mrb[0].mxu0
    %1051 = vmatprep.mubr.bf16.mxu0 0
    %1052 = vmatmul.mubr.bf16.gmra.mrb[0].mxu0 %v1003
    %v1053 = vpop.f32.mrb[0].mxu0
    %v1054 = vadd.f32 %v985, %v1053
    %v1055 = vpop.f32.mrb[0].mxu0
    %v1056 = vpop.f32.mrb[0].mxu0
    %v1057 = vadd.f32 %v985, %v1056
    %v1058 = vpop.f32.mrb[0].mxu0
    %1059 = vmatprep.mubr.bf16.mxu0 0
    %1060 = vmatmul.mubr.bf16.gmra.mrb[0].mxu0 %v1006
    %v1061 = vpop.f32.mrb[0].mxu0
    %v1062 = vadd.f32 %v985, %v1061
    %v1063 = vpop.f32.mrb[0].mxu0
    %v1064 = vpop.f32.mrb[0].mxu0
    %v1065 = vadd.f32 %v985, %v1064
    %v1066 = vpop.f32.mrb[0].mxu0
    %1067 = vmatprep.mubr.bf16.mxu0 0
    %1068 = vmatmul.mubr.bf16.gmra.mrb[0].mxu0 %v1009
    %v1069 = vpop.f32.mrb[0].mxu0
    %v1070 = vadd.f32 %v985, %v1069
    %v1071 = vpop.f32.mrb[0].mxu0
    %v1072 = vpop.f32.mrb[0].mxu0
    %v1073 = vadd.f32 %v985, %v1072
    %v1074 = vpop.f32.mrb[0].mxu0
    %1075 = vdwg.mxu0
    %v1076 = vadd.f32 %v1046, %v964
    %v1077 = vadd.f32 %v1049, %v965
    %v1078 = vadd.f32 %v1054, %v966
    %v1079 = vadd.f32 %v1057, %v967
    %v1080 = vadd.f32 %v1062, %v968
    %v1081 = vadd.f32 %v1065, %v969
    %v1082 = vadd.f32 %v1070, %v970
    %v1083 = vadd.f32 %v1073, %v971
    %v1084 = vsub.f32 0.0, %v1076
    %v1085 = vsub.f32 0.0, %v1077
    %v1086 = vsub.f32 0.0, %v1078
    %v1087 = vsub.f32 0.0, %v1079
    %v1088 = vsub.f32 0.0, %v1080
    %v1089 = vsub.f32 0.0, %v1081
    %v1090 = vsub.f32 0.0, %v1082
    %v1091 = vsub.f32 0.0, %v1083
    %v1092 = vmul.f32 %v1084, 1.442695
    %v1093 = vpow.pop %v1092
    %v1094 = vmul.f32 %v1085, 1.442695
    %v1095 = vpow.pop %v1094
    %v1096 = vmul.f32 %v1086, 1.442695
    %v1097 = vpow.pop %v1096
    %v1098 = vmul.f32 %v1087, 1.442695
    %v1099 = vpow.pop %v1098
    %v1100 = vmul.f32 %v1088, 1.442695
    %v1101 = vpow.pop %v1100
    %v1102 = vmul.f32 %v1089, 1.442695
    %v1103 = vpow.pop %v1102
    %v1104 = vmul.f32 %v1090, 1.442695
    %v1105 = vpow.pop %v1104
    %v1106 = vmul.f32 %v1091, 1.442695
    %v1107 = vpow.pop %v1106
    %v1108 = vadd.f32 %v1093, 1.0
    %v1109 = vadd.f32 %v1095, 1.0
    %v1110 = vadd.f32 %v1097, 1.0
    %v1111 = vadd.f32 %v1099, 1.0
    %v1112 = vadd.f32 %v1101, 1.0
    %v1113 = vadd.f32 %v1103, 1.0
    %v1114 = vadd.f32 %v1105, 1.0
    %v1115 = vadd.f32 %v1107, 1.0
    %v1116 = vrcp.pop %v1108
    %v1117 = vrcp.pop %v1109
    %v1118 = vrcp.pop %v1110
    %v1119 = vrcp.pop %v1111
    %v1120 = vrcp.pop %v1112
    %v1121 = vrcp.pop %v1113
    %v1122 = vrcp.pop %v1114
    %v1123 = vrcp.pop %v1115
    %v1124 = vmul.f32 %v1076, %v1116
    %v1125 = vmul.f32 %v1077, %v1117
    %v1126 = vmul.f32 %v1078, %v1118
    %v1127 = vmul.f32 %v1079, %v1119
    %v1128 = vmul.f32 %v1080, %v1120
    %v1129 = vmul.f32 %v1081, %v1121
    %v1130 = vmul.f32 %v1082, %v1122
    %v1131 = vmul.f32 %v1083, %v1123
    %v1132 = vld [vmem:[%s15] sm:$0x1]
    %v1133 = vld [vmem:[%s16] sm:$0x1]
    %v1134 = vsel %vm234, %v1124, 0.0
    %1135 = vadd.xlane.f32.xlu0 %v1134
    %v1136 = vpop.xlane.xlu0 %1135
    %v1137 = vsel %vm234, %v1125, 0.0
    %1138 = vadd.xlane.f32.xlu0 %v1137
    %v1139 = vpop.xlane.xlu0 %1138
    %v1140 = vsel %vm234, %v1126, 0.0
    %1141 = vadd.xlane.f32.xlu0 %v1140
    %v1142 = vpop.xlane.xlu0 %1141
    %v1143 = vsel %vm234, %v1127, 0.0
    %1144 = vadd.xlane.f32.xlu0 %v1143
    %v1145 = vpop.xlane.xlu0 %1144
    %v1146 = vsel %vm234, %v1128, 0.0
    %1147 = vadd.xlane.f32.xlu0 %v1146
    %v1148 = vpop.xlane.xlu0 %1147
    %v1149 = vsel %vm234, %v1129, 0.0
    %1150 = vadd.xlane.f32.xlu0 %v1149
    %v1151 = vpop.xlane.xlu0 %1150
    %v1152 = vsel %vm234, %v1130, 0.0
    %1153 = vadd.xlane.f32.xlu0 %v1152
    %v1154 = vpop.xlane.xlu0 %1153
    %v1155 = vsel %vm234, %v1131, 0.0
    %1156 = vadd.xlane.f32.xlu0 %v1155
    %v1157 = vpop.xlane.xlu0 %1156
    %v1158 = vmul.f32 %v1136, %v259
    %v1159 = vmul.f32 %v1139, %v259
    %v1160 = vmul.f32 %v1142, %v259
    %v1161 = vmul.f32 %v1145, %v259
    %v1162 = vmul.f32 %v1148, %v259
    %v1163 = vmul.f32 %v1151, %v259
    %v1164 = vmul.f32 %v1154, %v259
    %v1165 = vmul.f32 %v1157, %v259
    %v1166 = vsub.f32 %v1124, %v1158
    %v1167 = vsub.f32 %v1125, %v1159
    %v1168 = vsub.f32 %v1126, %v1160
    %v1169 = vsub.f32 %v1127, %v1161
    %v1170 = vsub.f32 %v1128, %v1162
    %v1171 = vsub.f32 %v1129, %v1163
    %v1172 = vsub.f32 %v1130, %v1164
    %v1173 = vsub.f32 %v1131, %v1165
    %v1174 = vmul.f32 %v1166, %v1166
    %v1175 = vmul.f32 %v1167, %v1167
    %v1176 = vmul.f32 %v1168, %v1168
    %v1177 = vmul.f32 %v1169, %v1169
    %v1178 = vmul.f32 %v1170, %v1170
    %v1179 = vmul.f32 %v1171, %v1171
    %v1180 = vmul.f32 %v1172, %v1172
    %v1181 = vmul.f32 %v1173, %v1173
    %v1182 = vsel %vm234, %v1174, 0.0
    %1183 = vadd.xlane.f32.xlu0 %v1182
    %v1184 = vpop.xlane.xlu0 %1183
    %v1185 = vsel %vm234, %v1175, 0.0
    %1186 = vadd.xlane.f32.xlu0 %v1185
    %v1187 = vpop.xlane.xlu0 %1186
    %v1188 = vsel %vm234, %v1176, 0.0
    %1189 = vadd.xlane.f32.xlu0 %v1188
    %v1190 = vpop.xlane.xlu0 %1189
    %v1191 = vsel %vm234, %v1177, 0.0
    %1192 = vadd.xlane.f32.xlu0 %v1191
    %v1193 = vpop.xlane.xlu0 %1192
    %v1194 = vsel %vm234, %v1178, 0.0
    %1195 = vadd.xlane.f32.xlu0 %v1194
    %v1196 = vpop.xlane.xlu0 %1195
    %v1197 = vsel %vm234, %v1179, 0.0
    %1198 = vadd.xlane.f32.xlu0 %v1197
    %v1199 = vpop.xlane.xlu0 %1198
    %v1200 = vsel %vm234, %v1180, 0.0
    %1201 = vadd.xlane.f32.xlu0 %v1200
    %v1202 = vpop.xlane.xlu0 %1201
    %v1203 = vsel %vm234, %v1181, 0.0
    %1204 = vadd.xlane.f32.xlu0 %v1203
    %v1205 = vpop.xlane.xlu0 %1204
    %v1206 = vmul.f32 %v1184, %v259
    %v1207 = vmul.f32 %v1187, %v259
    %v1208 = vmul.f32 %v1190, %v259
    %v1209 = vmul.f32 %v1193, %v259
    %v1210 = vmul.f32 %v1196, %v259
    %v1211 = vmul.f32 %v1199, %v259
    %v1212 = vmul.f32 %v1202, %v259
    %v1213 = vmul.f32 %v1205, %v259
    %v1214 = vadd.f32 %v1206, 0.1
    %v1215 = vadd.f32 %v1207, 0.1
    %v1216 = vadd.f32 %v1208, 0.1
    %v1217 = vadd.f32 %v1209, 0.1
    %v1218 = vadd.f32 %v1210, 0.1
    %v1219 = vadd.f32 %v1211, 0.1
    %v1220 = vadd.f32 %v1212, 0.1
    %v1221 = vadd.f32 %v1213, 0.1
    %v1222 = vrsqrt.pop %v1214
    %v1223 = vrsqrt.pop %v1215
    %v1224 = vrsqrt.pop %v1216
    %v1225 = vrsqrt.pop %v1217
    %v1226 = vrsqrt.pop %v1218
    %v1227 = vrsqrt.pop %v1219
    %v1228 = vrsqrt.pop %v1220
    %v1229 = vrsqrt.pop %v1221
    %v1230 = vmul.f32 %v1166, %v1222
    %v1231 = vmul.f32 %v1167, %v1223
    %v1232 = vmul.f32 %v1168, %v1224
    %v1233 = vmul.f32 %v1169, %v1225
    %v1234 = vmul.f32 %v1170, %v1226
    %v1235 = vmul.f32 %v1171, %v1227
    %v1236 = vmul.f32 %v1172, %v1228
    %v1237 = vmul.f32 %v1173, %v1229
    %v1239 = vlaneseq
    %v1240 = vshrl.u32 %v1239, 7
    %v1241 = vsub.s32 0, %v1240
    %v1242 = vrot.slane %v1132, %v1241
    %v1244 = vmul.f32 %v1230, %v1242
    %v1245 = vmul.f32 %v1231, %v1242
    %v1246 = vmul.f32 %v1232, %v1242
    %v1247 = vmul.f32 %v1233, %v1242
    %v1248 = vmul.f32 %v1234, %v1242
    %v1249 = vmul.f32 %v1235, %v1242
    %v1250 = vmul.f32 %v1236, %v1242
    %v1251 = vmul.f32 %v1237, %v1242
    %v1253 = vlaneseq
    %v1254 = vshrl.u32 %v1253, 7
    %v1255 = vsub.s32 0, %v1254
    %v1256 = vrot.slane %v1133, %v1255
    %v1258 = vadd.f32 %v1244, %v1256
    %v1259 = vadd.f32 %v1245, %v1256
    %v1260 = vadd.f32 %v1246, %v1256
    %v1261 = vadd.f32 %v1247, %v1256
    %v1262 = vadd.f32 %v1248, %v1256
    %v1263 = vadd.f32 %v1249, %v1256
    %v1264 = vadd.f32 %v1250, %v1256
    %v1265 = vadd.f32 %v1251, %v1256
    %v1266 = vadd.f32 %v964, %v1258
    %v1267 = vadd.f32 %v965, %v1259
    %v1268 = vadd.f32 %v966, %v1260
    %v1269 = vadd.f32 %v967, %v1261
    %v1270 = vadd.f32 %v968, %v1262
    %v1271 = vadd.f32 %v969, %v1263
    %v1272 = vadd.f32 %v970, %v1264
    %v1273 = vadd.f32 %v971, %v1265
    %v1274 = vpack.c.bf16 %v1259, %v1258
    %v1275 = vpack.c.bf16 %v1261, %v1260
    %v1276 = vpack.c.bf16 %v1263, %v1262
    %v1277 = vpack.c.bf16 %v1265, %v1264
    %v1278 = vld [vmem:[%s17] sm:$0xf]
    %v1279 = vld [vmem:[%s17 + $0x4] sm:$0xf]
    %v1280 = vld [vmem:[%s17 + $0x8] sm:$0xf]
    %v1281 = vld [vmem:[%s17 + $0xc] sm:$0xf]
    %v1282 = vld [vmem:[%s18] sm:$0x1]
    %v1284 = vlaneseq
    %v1285 = vshrl.u32 %v1284, 7
    %v1286 = vsub.s32 0, %v1285
    %v1287 = vrot.slane %v1282, %v1286
    %v1293 = vunpack.c.l.b16 %v1278
    %v1294 = vunpack.c.l.b16 %v1279
    %v1295 = vunpack.c.l.b16 %v1280
    %v1296 = vunpack.c.l.b16 %v1281
    %v1297 = vpack.c.b16 %v1294, %v1293
    %v1298 = vpack.c.b16 %v1296, %v1295
    %v1302 = vsel %vm234, %v1274, 0
    %v1305 = vsel %vm234, %v1275, 0
    %v1308 = vsel %vm234, %v1276, 0
    %v1311 = vsel %vm234, %v1277, 0
    %1313 = vmatprep.subr.bf16.mxu0 0
    %1314 = vmatpush1.bf16.msra.mxu0 %v1297
    %1315 = vmatprep.subr.bf16.mxu0 0
    %1316 = vmatpush1.bf16.msra.mxu0 %v1298
    %1317 = vmatprep.subr.bf16.mxu0 0
    %1318 = vmatpush1.bf16.msra.mxu0 0
    %1319 = vmatprep.subr.bf16.mxu0 0
    %1320 = vmatpush1.bf16.msra.mxu0 0
    %1321 = vmatprep.subr.bf16.mxu0 0
    %1322 = vmatpush1.bf16.msra.mxu0 0
    %1323 = vmatprep.subr.bf16.mxu0 0
    %1324 = vmatpush1.bf16.msra.mxu0 0
    %1325 = vmatprep.subr.bf16.mxu0 0
    %1326 = vmatpush1.bf16.msra.mxu0 0
    %1327 = vmatprep.subr.bf16.mxu0 0
    %1328 = vmatpush1.bf16.msra.mxu0 0
    %1329 = vmatprep.subr.bf16.mxu0 0
    %1330 = vmatpush1.bf16.msra.mxu0 0
    %1331 = vmatprep.subr.bf16.mxu0 0
    %1332 = vmatpush1.bf16.msra.mxu0 0
    %1333 = vmatprep.subr.bf16.mxu0 0
    %1334 = vmatpush1.bf16.msra.mxu0 0
    %1335 = vmatprep.subr.bf16.mxu0 0
    %1336 = vmatpush1.bf16.msra.mxu0 0
    %1337 = vmatprep.subr.bf16.mxu0 0
    %1338 = vmatpush1.bf16.msra.mxu0 0
    %1339 = vmatprep.subr.bf16.mxu0 0
    %1340 = vmatpush1.bf16.msra.mxu0 0
    %1341 = vmatprep.subr.bf16.mxu0 0
    %1342 = vmatpush1.bf16.msra.mxu0 0
    %1343 = vmatprep.subr.bf16.mxu0 0
    %1344 = vmatpush1.bf16.msra.mxu0 0
    %1345 = vmatprep.mubr.bf16.mxu0 0
    %1346 = vmatmul.mubr.bf16.gmra.mrb[0].mxu0 %v1302
    %v1347 = vpop.f32.mrb[0].mxu0
    %v1348 = vadd.f32 %v1287, %v1347
    %v1349 = vpop.f32.mrb[0].mxu0
    %v1350 = vpop.f32.mrb[0].mxu0
    %v1351 = vadd.f32 %v1287, %v1350
    %v1352 = vpop.f32.mrb[0].mxu0
    %1353 = vmatprep.mubr.bf16.mxu0 0
    %1354 = vmatmul.mubr.bf16.gmra.mrb[0].mxu0 %v1305
    %v1355 = vpop.f32.mrb[0].mxu0
    %v1356 = vadd.f32 %v1287, %v1355
    %v1357 = vpop.f32.mrb[0].mxu0
    %v1358 = vpop.f32.mrb[0].mxu0
    %v1359 = vadd.f32 %v1287, %v1358
    %v1360 = vpop.f32.mrb[0].mxu0
    %1361 = vmatprep.mubr.bf16.mxu0 0
    %1362 = vmatmul.mubr.bf16.gmra.mrb[0].mxu0 %v1308
    %v1363 = vpop.f32.mrb[0].mxu0
    %v1364 = vadd.f32 %v1287, %v1363
    %v1365 = vpop.f32.mrb[0].mxu0
    %v1366 = vpop.f32.mrb[0].mxu0
    %v1367 = vadd.f32 %v1287, %v1366
    %v1368 = vpop.f32.mrb[0].mxu0
    %1369 = vmatprep.mubr.bf16.mxu0 0
    %1370 = vmatmul.mubr.bf16.gmra.mrb[0].mxu0 %v1311
    %v1371 = vpop.f32.mrb[0].mxu0
    %v1372 = vadd.f32 %v1287, %v1371
    %v1373 = vpop.f32.mrb[0].mxu0
    %v1374 = vpop.f32.mrb[0].mxu0
    %v1375 = vadd.f32 %v1287, %v1374
    %v1376 = vpop.f32.mrb[0].mxu0
    %1377 = vdwg.mxu0
    %v1378 = vadd.f32 %v1348, %v1266
    %v1379 = vadd.f32 %v1351, %v1267
    %v1380 = vadd.f32 %v1356, %v1268
    %v1381 = vadd.f32 %v1359, %v1269
    %v1382 = vadd.f32 %v1364, %v1270
    %v1383 = vadd.f32 %v1367, %v1271
    %v1384 = vadd.f32 %v1372, %v1272
    %v1385 = vadd.f32 %v1375, %v1273
    %v1386 = vsub.f32 0.0, %v1378
    %v1387 = vsub.f32 0.0, %v1379
    %v1388 = vsub.f32 0.0, %v1380
    %v1389 = vsub.f32 0.0, %v1381
    %v1390 = vsub.f32 0.0, %v1382
    %v1391 = vsub.f32 0.0, %v1383
    %v1392 = vsub.f32 0.0, %v1384
    %v1393 = vsub.f32 0.0, %v1385
    %v1394 = vmul.f32 %v1386, 1.442695
    %v1395 = vpow.pop %v1394
    %v1396 = vmul.f32 %v1387, 1.442695
    %v1397 = vpow.pop %v1396
    %v1398 = vmul.f32 %v1388, 1.442695
    %v1399 = vpow.pop %v1398
    %v1400 = vmul.f32 %v1389, 1.442695
    %v1401 = vpow.pop %v1400
    %v1402 = vmul.f32 %v1390, 1.442695
    %v1403 = vpow.pop %v1402
    %v1404 = vmul.f32 %v1391, 1.442695
    %v1405 = vpow.pop %v1404
    %v1406 = vmul.f32 %v1392, 1.442695
    %v1407 = vpow.pop %v1406
    %v1408 = vmul.f32 %v1393, 1.442695
    %v1409 = vpow.pop %v1408
    %v1410 = vadd.f32 %v1395, 1.0
    %v1411 = vadd.f32 %v1397, 1.0
    %v1412 = vadd.f32 %v1399, 1.0
    %v1413 = vadd.f32 %v1401, 1.0
    %v1414 = vadd.f32 %v1403, 1.0
    %v1415 = vadd.f32 %v1405, 1.0
    %v1416 = vadd.f32 %v1407, 1.0
    %v1417 = vadd.f32 %v1409, 1.0
    %v1418 = vrcp.pop %v1410
    %v1419 = vrcp.pop %v1411
    %v1420 = vrcp.pop %v1412
    %v1421 = vrcp.pop %v1413
    %v1422 = vrcp.pop %v1414
    %v1423 = vrcp.pop %v1415
    %v1424 = vrcp.pop %v1416
    %v1425 = vrcp.pop %v1417
    %v1426 = vmul.f32 %v1378, %v1418
    %v1427 = vmul.f32 %v1379, %v1419
    %v1428 = vmul.f32 %v1380, %v1420
    %v1429 = vmul.f32 %v1381, %v1421
    %v1430 = vmul.f32 %v1382, %v1422
    %v1431 = vmul.f32 %v1383, %v1423
    %v1432 = vmul.f32 %v1384, %v1424
    %v1433 = vmul.f32 %v1385, %v1425
    %v1434 = vld [vmem:[%s19] sm:$0x1]
    %v1435 = vld [vmem:[%s20] sm:$0x1]
    %v1436 = vsel %vm234, %v1426, 0.0
    %1437 = vadd.xlane.f32.xlu0 %v1436
    %v1438 = vpop.xlane.xlu0 %1437
    %v1439 = vsel %vm234, %v1427, 0.0
    %1440 = vadd.xlane.f32.xlu0 %v1439
    %v1441 = vpop.xlane.xlu0 %1440
    %v1442 = vsel %vm234, %v1428, 0.0
    %1443 = vadd.xlane.f32.xlu0 %v1442
    %v1444 = vpop.xlane.xlu0 %1443
    %v1445 = vsel %vm234, %v1429, 0.0
    %1446 = vadd.xlane.f32.xlu0 %v1445
    %v1447 = vpop.xlane.xlu0 %1446
    %v1448 = vsel %vm234, %v1430, 0.0
    %1449 = vadd.xlane.f32.xlu0 %v1448
    %v1450 = vpop.xlane.xlu0 %1449
    %v1451 = vsel %vm234, %v1431, 0.0
    %1452 = vadd.xlane.f32.xlu0 %v1451
    %v1453 = vpop.xlane.xlu0 %1452
    %v1454 = vsel %vm234, %v1432, 0.0
    %1455 = vadd.xlane.f32.xlu0 %v1454
    %v1456 = vpop.xlane.xlu0 %1455
    %v1457 = vsel %vm234, %v1433, 0.0
    %1458 = vadd.xlane.f32.xlu0 %v1457
    %v1459 = vpop.xlane.xlu0 %1458
    %v1460 = vmul.f32 %v1438, %v259
    %v1461 = vmul.f32 %v1441, %v259
    %v1462 = vmul.f32 %v1444, %v259
    %v1463 = vmul.f32 %v1447, %v259
    %v1464 = vmul.f32 %v1450, %v259
    %v1465 = vmul.f32 %v1453, %v259
    %v1466 = vmul.f32 %v1456, %v259
    %v1467 = vmul.f32 %v1459, %v259
    %v1468 = vsub.f32 %v1426, %v1460
    %v1469 = vsub.f32 %v1427, %v1461
    %v1470 = vsub.f32 %v1428, %v1462
    %v1471 = vsub.f32 %v1429, %v1463
    %v1472 = vsub.f32 %v1430, %v1464
    %v1473 = vsub.f32 %v1431, %v1465
    %v1474 = vsub.f32 %v1432, %v1466
    %v1475 = vsub.f32 %v1433, %v1467
    %v1476 = vmul.f32 %v1468, %v1468
    %v1477 = vmul.f32 %v1469, %v1469
    %v1478 = vmul.f32 %v1470, %v1470
    %v1479 = vmul.f32 %v1471, %v1471
    %v1480 = vmul.f32 %v1472, %v1472
    %v1481 = vmul.f32 %v1473, %v1473
    %v1482 = vmul.f32 %v1474, %v1474
    %v1483 = vmul.f32 %v1475, %v1475
    %v1484 = vsel %vm234, %v1476, 0.0
    %1485 = vadd.xlane.f32.xlu0 %v1484
    %v1486 = vpop.xlane.xlu0 %1485
    %v1487 = vsel %vm234, %v1477, 0.0
    %1488 = vadd.xlane.f32.xlu0 %v1487
    %v1489 = vpop.xlane.xlu0 %1488
    %v1490 = vsel %vm234, %v1478, 0.0
    %1491 = vadd.xlane.f32.xlu0 %v1490
    %v1492 = vpop.xlane.xlu0 %1491
    %v1493 = vsel %vm234, %v1479, 0.0
    %1494 = vadd.xlane.f32.xlu0 %v1493
    %v1495 = vpop.xlane.xlu0 %1494
    %v1496 = vsel %vm234, %v1480, 0.0
    %1497 = vadd.xlane.f32.xlu0 %v1496
    %v1498 = vpop.xlane.xlu0 %1497
    %v1499 = vsel %vm234, %v1481, 0.0
    %1500 = vadd.xlane.f32.xlu0 %v1499
    %v1501 = vpop.xlane.xlu0 %1500
    %v1502 = vsel %vm234, %v1482, 0.0
    %1503 = vadd.xlane.f32.xlu0 %v1502
    %v1504 = vpop.xlane.xlu0 %1503
    %v1505 = vsel %vm234, %v1483, 0.0
    %1506 = vadd.xlane.f32.xlu0 %v1505
    %v1507 = vpop.xlane.xlu0 %1506
    %v1508 = vmul.f32 %v1486, %v259
    %v1509 = vmul.f32 %v1489, %v259
    %v1510 = vmul.f32 %v1492, %v259
    %v1511 = vmul.f32 %v1495, %v259
    %v1512 = vmul.f32 %v1498, %v259
    %v1513 = vmul.f32 %v1501, %v259
    %v1514 = vmul.f32 %v1504, %v259
    %v1515 = vmul.f32 %v1507, %v259
    %v1516 = vadd.f32 %v1508, 0.1
    %v1517 = vadd.f32 %v1509, 0.1
    %v1518 = vadd.f32 %v1510, 0.1
    %v1519 = vadd.f32 %v1511, 0.1
    %v1520 = vadd.f32 %v1512, 0.1
    %v1521 = vadd.f32 %v1513, 0.1
    %v1522 = vadd.f32 %v1514, 0.1
    %v1523 = vadd.f32 %v1515, 0.1
    %v1524 = vrsqrt.pop %v1516
    %v1525 = vrsqrt.pop %v1517
    %v1526 = vrsqrt.pop %v1518
    %v1527 = vrsqrt.pop %v1519
    %v1528 = vrsqrt.pop %v1520
    %v1529 = vrsqrt.pop %v1521
    %v1530 = vrsqrt.pop %v1522
    %v1531 = vrsqrt.pop %v1523
    %v1532 = vmul.f32 %v1468, %v1524
    %v1533 = vmul.f32 %v1469, %v1525
    %v1534 = vmul.f32 %v1470, %v1526
    %v1535 = vmul.f32 %v1471, %v1527
    %v1536 = vmul.f32 %v1472, %v1528
    %v1537 = vmul.f32 %v1473, %v1529
    %v1538 = vmul.f32 %v1474, %v1530
    %v1539 = vmul.f32 %v1475, %v1531
    %v1541 = vlaneseq
    %v1542 = vshrl.u32 %v1541, 7
    %v1543 = vsub.s32 0, %v1542
    %v1544 = vrot.slane %v1434, %v1543
    %v1546 = vmul.f32 %v1532, %v1544
    %v1547 = vmul.f32 %v1533, %v1544
    %v1548 = vmul.f32 %v1534, %v1544
    %v1549 = vmul.f32 %v1535, %v1544
    %v1550 = vmul.f32 %v1536, %v1544
    %v1551 = vmul.f32 %v1537, %v1544
    %v1552 = vmul.f32 %v1538, %v1544
    %v1553 = vmul.f32 %v1539, %v1544
    %v1555 = vlaneseq
    %v1556 = vshrl.u32 %v1555, 7
    %v1557 = vsub.s32 0, %v1556
    %v1558 = vrot.slane %v1435, %v1557
    %v1560 = vadd.f32 %v1546, %v1558
    %v1561 = vadd.f32 %v1547, %v1558
    %v1562 = vadd.f32 %v1548, %v1558
    %v1563 = vadd.f32 %v1549, %v1558
    %v1564 = vadd.f32 %v1550, %v1558
    %v1565 = vadd.f32 %v1551, %v1558
    %v1566 = vadd.f32 %v1552, %v1558
    %v1567 = vadd.f32 %v1553, %v1558
    %v1568 = vpack.c.bf16 %v1561, %v1560
    %v1569 = vpack.c.bf16 %v1563, %v1562
    %v1570 = vpack.c.bf16 %v1565, %v1564
    %v1571 = vpack.c.bf16 %v1567, %v1566
    %v1572 = vld [vmem:[%s21] sm:$0xf]
    %v1573 = vld [vmem:[%s21 + $0x4] sm:$0xf]
    %v1574 = vld [vmem:[%s21 + $0x8] sm:$0xf]
    %v1575 = vld [vmem:[%s21 + $0xc] sm:$0xf]
    %v1576 = vld [vmem:[%s22] sm:$0x1]
    %v1578 = vlaneseq
    %v1579 = vshrl.u32 %v1578, 7
    %v1580 = vsub.s32 0, %v1579
    %v1581 = vrot.slane %v1576, %v1580
    %v1587 = vunpack.c.l.b16 %v1572
    %v1588 = vunpack.c.l.b16 %v1573
    %v1589 = vunpack.c.l.b16 %v1574
    %v1590 = vunpack.c.l.b16 %v1575
    %v1591 = vpack.c.b16 %v1588, %v1587
    %v1592 = vpack.c.b16 %v1590, %v1589
    %v1596 = vsel %vm234, %v1568, 0
    %v1599 = vsel %vm234, %v1569, 0
    %v1602 = vsel %vm234, %v1570, 0
    %v1605 = vsel %vm234, %v1571, 0
    %1607 = vmatprep.subr.bf16.mxu0 0
    %1608 = vmatpush1.bf16.msra.mxu0 %v1591
    %1609 = vmatprep.subr.bf16.mxu0 0
    %1610 = vmatpush1.bf16.msra.mxu0 %v1592
    %1611 = vmatprep.subr.bf16.mxu0 0
    %1612 = vmatpush1.bf16.msra.mxu0 0
    %1613 = vmatprep.subr.bf16.mxu0 0
    %1614 = vmatpush1.bf16.msra.mxu0 0
    %1615 = vmatprep.subr.bf16.mxu0 0
    %1616 = vmatpush1.bf16.msra.mxu0 0
    %1617 = vmatprep.subr.bf16.mxu0 0
    %1618 = vmatpush1.bf16.msra.mxu0 0
    %1619 = vmatprep.subr.bf16.mxu0 0
    %1620 = vmatpush1.bf16.msra.mxu0 0
    %1621 = vmatprep.subr.bf16.mxu0 0
    %1622 = vmatpush1.bf16.msra.mxu0 0
    %1623 = vmatprep.subr.bf16.mxu0 0
    %1624 = vmatpush1.bf16.msra.mxu0 0
    %1625 = vmatprep.subr.bf16.mxu0 0
    %1626 = vmatpush1.bf16.msra.mxu0 0
    %1627 = vmatprep.subr.bf16.mxu0 0
    %1628 = vmatpush1.bf16.msra.mxu0 0
    %1629 = vmatprep.subr.bf16.mxu0 0
    %1630 = vmatpush1.bf16.msra.mxu0 0
    %1631 = vmatprep.subr.bf16.mxu0 0
    %1632 = vmatpush1.bf16.msra.mxu0 0
    %1633 = vmatprep.subr.bf16.mxu0 0
    %1634 = vmatpush1.bf16.msra.mxu0 0
    %1635 = vmatprep.subr.bf16.mxu0 0
    %1636 = vmatpush1.bf16.msra.mxu0 0
    %1637 = vmatprep.subr.bf16.mxu0 0
    %1638 = vmatpush1.bf16.msra.mxu0 0
    %1639 = vmatprep.mubr.bf16.mxu0 0
    %1640 = vmatmul.mubr.bf16.gmra.mrb[0].mxu0 %v1596
    %v1641 = vpop.f32.mrb[0].mxu0
    %v1642 = vadd.f32 %v1581, %v1641
    %v1643 = vpop.f32.mrb[0].mxu0
    %v1644 = vpop.f32.mrb[0].mxu0
    %v1645 = vadd.f32 %v1581, %v1644
    %v1646 = vpop.f32.mrb[0].mxu0
    %1647 = vmatprep.mubr.bf16.mxu0 0
    %1648 = vmatmul.mubr.bf16.gmra.mrb[0].mxu0 %v1599
    %v1649 = vpop.f32.mrb[0].mxu0
    %v1650 = vadd.f32 %v1581, %v1649
    %v1651 = vpop.f32.mrb[0].mxu0
    %v1652 = vpop.f32.mrb[0].mxu0
    %v1653 = vadd.f32 %v1581, %v1652
    %v1654 = vpop.f32.mrb[0].mxu0
    %1655 = vmatprep.mubr.bf16.mxu0 0
    %1656 = vmatmul.mubr.bf16.gmra.mrb[0].mxu0 %v1602
    %v1657 = vpop.f32.mrb[0].mxu0
    %v1658 = vadd.f32 %v1581, %v1657
    %v1659 = vpop.f32.mrb[0].mxu0
    %v1660 = vpop.f32.mrb[0].mxu0
    %v1661 = vadd.f32 %v1581, %v1660
    %v1662 = vpop.f32.mrb[0].mxu0
    %1663 = vmatprep.mubr.bf16.mxu0 0
    %1664 = vmatmul.mubr.bf16.gmra.mrb[0].mxu0 %v1605
    %v1665 = vpop.f32.mrb[0].mxu0
    %v1666 = vadd.f32 %v1581, %v1665
    %v1667 = vpop.f32.mrb[0].mxu0
    %v1668 = vpop.f32.mrb[0].mxu0
    %v1669 = vadd.f32 %v1581, %v1668
    %v1670 = vpop.f32.mrb[0].mxu0
    %1671 = vdwg.mxu0
    %v1672 = vsub.f32 0.0, %v1642
    %v1673 = vsub.f32 0.0, %v1645
    %v1674 = vsub.f32 0.0, %v1650
    %v1675 = vsub.f32 0.0, %v1653
    %v1676 = vsub.f32 0.0, %v1658
    %v1677 = vsub.f32 0.0, %v1661
    %v1678 = vsub.f32 0.0, %v1666
    %v1679 = vsub.f32 0.0, %v1669
    %v1680 = vmul.f32 %v1672, 1.442695
    %v1681 = vpow.pop %v1680
    %v1682 = vmul.f32 %v1673, 1.442695
    %v1683 = vpow.pop %v1682
    %v1684 = vmul.f32 %v1674, 1.442695
    %v1685 = vpow.pop %v1684
    %v1686 = vmul.f32 %v1675, 1.442695
    %v1687 = vpow.pop %v1686
    %v1688 = vmul.f32 %v1676, 1.442695
    %v1689 = vpow.pop %v1688
    %v1690 = vmul.f32 %v1677, 1.442695
    %v1691 = vpow.pop %v1690
    %v1692 = vmul.f32 %v1678, 1.442695
    %v1693 = vpow.pop %v1692
    %v1694 = vmul.f32 %v1679, 1.442695
    %v1695 = vpow.pop %v1694
    %v1696 = vadd.f32 %v1681, 1.0
    %v1697 = vadd.f32 %v1683, 1.0
    %v1698 = vadd.f32 %v1685, 1.0
    %v1699 = vadd.f32 %v1687, 1.0
    %v1700 = vadd.f32 %v1689, 1.0
    %v1701 = vadd.f32 %v1691, 1.0
    %v1702 = vadd.f32 %v1693, 1.0
    %v1703 = vadd.f32 %v1695, 1.0
    %v1704 = vrcp.pop %v1696
    %v1705 = vrcp.pop %v1697
    %v1706 = vrcp.pop %v1698
    %v1707 = vrcp.pop %v1699
    %v1708 = vrcp.pop %v1700
    %v1709 = vrcp.pop %v1701
    %v1710 = vrcp.pop %v1702
    %v1711 = vrcp.pop %v1703
    %v1712 = vpack.c.bf16 %v1705, %v1704
    %v1713 = vpack.c.bf16 %v1707, %v1706
    %v1714 = vpack.c.bf16 %v1709, %v1708
    %v1715 = vpack.c.bf16 %v1711, %v1710
    %v1716 = vld [vmem:[%s23] sm:$0xf]
    %v1717 = vld [vmem:[%s24] sm:$0x1]
    %v1719 = vlaneseq
    %v1720 = vshrl.u32 %v1719, 7
    %v1721 = vsub.s32 0, %v1720
    %v1722 = vrot.slane %v1717, %v1721
    %v1725 = vsel %vm115, %v1716, 0
    %1727 = vmatprep.subr.bf16.mxu0 0
    %1728 = vmatpush1.bf16.msra.mxu0 %v1725
    %1729 = vmatprep.subr.bf16.mxu0 0
    %1730 = vmatpush1.bf16.msra.mxu0 0
    %1731 = vmatprep.subr.bf16.mxu0 0
    %1732 = vmatpush1.bf16.msra.mxu0 0
    %1733 = vmatprep.subr.bf16.mxu0 0
    %1734 = vmatpush1.bf16.msra.mxu0 0
    %1735 = vmatprep.subr.bf16.mxu0 0
    %1736 = vmatpush1.bf16.msra.mxu0 0
    %1737 = vmatprep.subr.bf16.mxu0 0
    %1738 = vmatpush1.bf16.msra.mxu0 0
    %1739 = vmatprep.subr.bf16.mxu0 0
    %1740 = vmatpush1.bf16.msra.mxu0 0
    %1741 = vmatprep.subr.bf16.mxu0 0
    %1742 = vmatpush1.bf16.msra.mxu0 0
    %1743 = vmatprep.subr.bf16.mxu0 0
    %1744 = vmatpush1.bf16.msra.mxu0 0
    %1745 = vmatprep.subr.bf16.mxu0 0
    %1746 = vmatpush1.bf16.msra.mxu0 0
    %1747 = vmatprep.subr.bf16.mxu0 0
    %1748 = vmatpush1.bf16.msra.mxu0 0
    %1749 = vmatprep.subr.bf16.mxu0 0
    %1750 = vmatpush1.bf16.msra.mxu0 0
    %1751 = vmatprep.subr.bf16.mxu0 0
    %1752 = vmatpush1.bf16.msra.mxu0 0
    %1753 = vmatprep.subr.bf16.mxu0 0
    %1754 = vmatpush1.bf16.msra.mxu0 0
    %1755 = vmatprep.subr.bf16.mxu0 0
    %1756 = vmatpush1.bf16.msra.mxu0 0
    %1757 = vmatprep.subr.bf16.mxu0 0
    %1758 = vmatpush1.bf16.msra.mxu0 0
    %1759 = vmatprep.mubr.bf16.mxu0 0
    %1760 = vmatmul.mubr.bf16.gmra.mrb[0].mxu0 %v104
    %v1761 = vpop.f32.mrb[0].mxu0
    %v1762 = vadd.f32 %v1722, %v1761
    %v1763 = vpop.f32.mrb[0].mxu0
    %v1764 = vpop.f32.mrb[0].mxu0
    %v1765 = vadd.f32 %v1722, %v1764
    %v1766 = vpop.f32.mrb[0].mxu0
    %1767 = vmatprep.mubr.bf16.mxu0 0
    %1768 = vmatmul.mubr.bf16.gmra.mrb[0].mxu0 %v107
    %v1769 = vpop.f32.mrb[0].mxu0
    %v1770 = vadd.f32 %v1722, %v1769
    %v1771 = vpop.f32.mrb[0].mxu0
    %v1772 = vpop.f32.mrb[0].mxu0
    %v1773 = vadd.f32 %v1722, %v1772
    %v1774 = vpop.f32.mrb[0].mxu0
    %1775 = vmatprep.mubr.bf16.mxu0 0
    %1776 = vmatmul.mubr.bf16.gmra.mrb[0].mxu0 %v110
    %v1777 = vpop.f32.mrb[0].mxu0
    %v1778 = vadd.f32 %v1722, %v1777
    %v1779 = vpop.f32.mrb[0].mxu0
    %v1780 = vpop.f32.mrb[0].mxu0
    %v1781 = vadd.f32 %v1722, %v1780
    %v1782 = vpop.f32.mrb[0].mxu0
    %1783 = vmatprep.mubr.bf16.mxu0 0
    %1784 = vmatmul.mubr.bf16.gmra.mrb[0].mxu0 %v113
    %v1785 = vpop.f32.mrb[0].mxu0
    %v1786 = vadd.f32 %v1722, %v1785
    %v1787 = vpop.f32.mrb[0].mxu0
    %v1788 = vpop.f32.mrb[0].mxu0
    %v1789 = vadd.f32 %v1722, %v1788
    %v1790 = vpop.f32.mrb[0].mxu0
    %1791 = vdwg.mxu0
    %v1792 = vsub.f32 0.0, %v1762
    %v1793 = vsub.f32 0.0, %v1765
    %v1794 = vsub.f32 0.0, %v1770
    %v1795 = vsub.f32 0.0, %v1773
    %v1796 = vsub.f32 0.0, %v1778
    %v1797 = vsub.f32 0.0, %v1781
    %v1798 = vsub.f32 0.0, %v1786
    %v1799 = vsub.f32 0.0, %v1789
    %v1800 = vmul.f32 %v1792, 1.442695
    %v1801 = vpow.pop %v1800
    %v1802 = vmul.f32 %v1793, 1.442695
    %v1803 = vpow.pop %v1802
    %v1804 = vmul.f32 %v1794, 1.442695
    %v1805 = vpow.pop %v1804
    %v1806 = vmul.f32 %v1795, 1.442695
    %v1807 = vpow.pop %v1806
    %v1808 = vmul.f32 %v1796, 1.442695
    %v1809 = vpow.pop %v1808
    %v1810 = vmul.f32 %v1797, 1.442695
    %v1811 = vpow.pop %v1810
    %v1812 = vmul.f32 %v1798, 1.442695
    %v1813 = vpow.pop %v1812
    %v1814 = vmul.f32 %v1799, 1.442695
    %v1815 = vpow.pop %v1814
    %v1816 = vadd.f32 %v1801, 1.0
    %v1817 = vadd.f32 %v1803, 1.0
    %v1818 = vadd.f32 %v1805, 1.0
    %v1819 = vadd.f32 %v1807, 1.0
    %v1820 = vadd.f32 %v1809, 1.0
    %v1821 = vadd.f32 %v1811, 1.0
    %v1822 = vadd.f32 %v1813, 1.0
    %v1823 = vadd.f32 %v1815, 1.0
    %v1824 = vrcp.pop %v1816
    %v1825 = vrcp.pop %v1817
    %v1826 = vrcp.pop %v1818
    %v1827 = vrcp.pop %v1819
    %v1828 = vrcp.pop %v1820
    %v1829 = vrcp.pop %v1821
    %v1830 = vrcp.pop %v1822
    %v1831 = vrcp.pop %v1823
    %v1832 = vpack.c.bf16 %v1825, %v1824
    %v1833 = vpack.c.bf16 %v1827, %v1826
    %v1834 = vpack.c.bf16 %v1829, %v1828
    %v1835 = vpack.c.bf16 %v1831, %v1830
    %vm1836 = vcmask 130048
    %v1838 = vsel %vm1836, %v1712, 0
    %1840 = vmatprep.subr.bf16.mxu0 0
    %1841 = vmatpush1.bf16.msra.mxu0 %v1832
    %1842 = vmatprep.subr.bf16.mxu0 0
    %1843 = vmatpush1.bf16.msra.mxu0 0
    %1844 = vmatprep.subr.bf16.mxu0 0
    %1845 = vmatpush1.bf16.msra.mxu0 0
    %1846 = vmatprep.subr.bf16.mxu0 0
    %1847 = vmatpush1.bf16.msra.mxu0 0
    %1848 = vmatprep.subr.bf16.mxu0 0
    %1849 = vmatpush1.bf16.msra.mxu0 0
    %1850 = vmatprep.subr.bf16.mxu0 0
    %1851 = vmatpush1.bf16.msra.mxu0 0
    %1852 = vmatprep.subr.bf16.mxu0 0
    %1853 = vmatpush1.bf16.msra.mxu0 0
    %1854 = vmatprep.subr.bf16.mxu0 0
    %1855 = vmatpush1.bf16.msra.mxu0 0
    %1856 = vmatprep.subr.bf16.mxu0 0
    %1857 = vmatpush1.bf16.msra.mxu0 0
    %1858 = vmatprep.subr.bf16.mxu0 0
    %1859 = vmatpush1.bf16.msra.mxu0 0
    %1860 = vmatprep.subr.bf16.mxu0 0
    %1861 = vmatpush1.bf16.msra.mxu0 0
    %1862 = vmatprep.subr.bf16.mxu0 0
    %1863 = vmatpush1.bf16.msra.mxu0 0
    %1864 = vmatprep.subr.bf16.mxu0 0
    %1865 = vmatpush1.bf16.msra.mxu0 0
    %1866 = vmatprep.subr.bf16.mxu0 0
    %1867 = vmatpush1.bf16.msra.mxu0 0
    %1868 = vmatprep.subr.bf16.mxu0 0
    %1869 = vmatpush1.bf16.msra.mxu0 0
    %1870 = vmatprep.subr.bf16.mxu0 0
    %1871 = vmatpush1.bf16.msra.mxu0 0
    %1872 = vmatprep.mubr.bf16.mxu0 0
    %1873 = vmatmul.mubr.bf16.gmra.mrb[0].mxu0 %v1838
    %v1874 = vpop.f32.mrb[0].mxu0
    %v1875 = vadd.f32 0.0, %v1874
    %v1876 = vpop.f32.mrb[0].mxu0
    %v1877 = vpop.f32.mrb[0].mxu0
    %v1878 = vadd.f32 0.0, %v1877
    %v1879 = vpop.f32.mrb[0].mxu0
    %1880 = vdwg.mxu0
    %1881 = vst.msk [vmem:[#allocation2] sm:$0xff] %vm1836, %v1875
    %1882 = vst.msk [vmem:[#allocation2 + $0x8] sm:$0xff] %vm1836, %v1878
    %v1884 = vsel %vm1836, %v1713, 0
    %1886 = vmatprep.subr.bf16.mxu0 0
    %1887 = vmatpush1.bf16.msra.mxu0 %v1833
    %1888 = vmatprep.subr.bf16.mxu0 0
    %1889 = vmatpush1.bf16.msra.mxu0 0
    %1890 = vmatprep.subr.bf16.mxu0 0
    %1891 = vmatpush1.bf16.msra.mxu0 0
    %1892 = vmatprep.subr.bf16.mxu0 0
    %1893 = vmatpush1.bf16.msra.mxu0 0
    %1894 = vmatprep.subr.bf16.mxu0 0
    %1895 = vmatpush1.bf16.msra.mxu0 0
    %1896 = vmatprep.subr.bf16.mxu0 0
    %1897 = vmatpush1.bf16.msra.mxu0 0
    %1898 = vmatprep.subr.bf16.mxu0 0
    %1899 = vmatpush1.bf16.msra.mxu0 0
    %1900 = vmatprep.subr.bf16.mxu0 0
    %1901 = vmatpush1.bf16.msra.mxu0 0
    %1902 = vmatprep.subr.bf16.mxu0 0
    %1903 = vmatpush1.bf16.msra.mxu0 0
    %1904 = vmatprep.subr.bf16.mxu0 0
    %1905 = vmatpush1.bf16.msra.mxu0 0
    %1906 = vmatprep.subr.bf16.mxu0 0
    %1907 = vmatpush1.bf16.msra.mxu0 0
    %1908 = vmatprep.subr.bf16.mxu0 0
    %1909 = vmatpush1.bf16.msra.mxu0 0
    %1910 = vmatprep.subr.bf16.mxu0 0
    %1911 = vmatpush1.bf16.msra.mxu0 0
    %1912 = vmatprep.subr.bf16.mxu0 0
    %1913 = vmatpush1.bf16.msra.mxu0 0
    %1914 = vmatprep.subr.bf16.mxu0 0
    %1915 = vmatpush1.bf16.msra.mxu0 0
    %1916 = vmatprep.subr.bf16.mxu0 0
    %1917 = vmatpush1.bf16.msra.mxu0 0
    %1918 = vmatprep.mubr.bf16.mxu0 0
    %1919 = vmatmul.mubr.bf16.gmra.mrb[0].mxu0 %v1884
    %v1920 = vpop.f32.mrb[0].mxu0
    %v1921 = vadd.f32 0.0, %v1920
    %v1922 = vpop.f32.mrb[0].mxu0
    %v1923 = vpop.f32.mrb[0].mxu0
    %v1924 = vadd.f32 0.0, %v1923
    %v1925 = vpop.f32.mrb[0].mxu0
    %1926 = vdwg.mxu0
    %s1927 = scalar_lea.vmem [#allocation2], 16
    %1928 = vst.msk [vmem:[%s1927] sm:$0xff] %vm1836, %v1921
    %1929 = vst.msk [vmem:[%s1927 + $0x8] sm:$0xff] %vm1836, %v1924
    %v1931 = vsel %vm1836, %v1714, 0
    %1933 = vmatprep.subr.bf16.mxu0 0
    %1934 = vmatpush1.bf16.msra.mxu0 %v1834
    %1935 = vmatprep.subr.bf16.mxu0 0
    %1936 = vmatpush1.bf16.msra.mxu0 0
    %1937 = vmatprep.subr.bf16.mxu0 0
    %1938 = vmatpush1.bf16.msra.mxu0 0
    %1939 = vmatprep.subr.bf16.mxu0 0
    %1940 = vmatpush1.bf16.msra.mxu0 0
    %1941 = vmatprep.subr.bf16.mxu0 0
    %1942 = vmatpush1.bf16.msra.mxu0 0
    %1943 = vmatprep.subr.bf16.mxu0 0
    %1944 = vmatpush1.bf16.msra.mxu0 0
    %1945 = vmatprep.subr.bf16.mxu0 0
    %1946 = vmatpush1.bf16.msra.mxu0 0
    %1947 = vmatprep.subr.bf16.mxu0 0
    %1948 = vmatpush1.bf16.msra.mxu0 0
    %1949 = vmatprep.subr.bf16.mxu0 0
    %1950 = vmatpush1.bf16.msra.mxu0 0
    %1951 = vmatprep.subr.bf16.mxu0 0
    %1952 = vmatpush1.bf16.msra.mxu0 0
    %1953 = vmatprep.subr.bf16.mxu0 0
    %1954 = vmatpush1.bf16.msra.mxu0 0
    %1955 = vmatprep.subr.bf16.mxu0 0
    %1956 = vmatpush1.bf16.msra.mxu0 0
    %1957 = vmatprep.subr.bf16.mxu0 0
    %1958 = vmatpush1.bf16.msra.mxu0 0
    %1959 = vmatprep.subr.bf16.mxu0 0
    %1960 = vmatpush1.bf16.msra.mxu0 0
    %1961 = vmatprep.subr.bf16.mxu0 0
    %1962 = vmatpush1.bf16.msra.mxu0 0
    %1963 = vmatprep.subr.bf16.mxu0 0
    %1964 = vmatpush1.bf16.msra.mxu0 0
    %1965 = vmatprep.mubr.bf16.mxu0 0
    %1966 = vmatmul.mubr.bf16.gmra.mrb[0].mxu0 %v1931
    %v1967 = vpop.f32.mrb[0].mxu0
    %v1968 = vadd.f32 0.0, %v1967
    %v1969 = vpop.f32.mrb[0].mxu0
    %v1970 = vpop.f32.mrb[0].mxu0
    %v1971 = vadd.f32 0.0, %v1970
    %v1972 = vpop.f32.mrb[0].mxu0
    %1973 = vdwg.mxu0
    %s1974 = scalar_lea.vmem [#allocation2], 32
    %1975 = vst.msk [vmem:[%s1974] sm:$0xff] %vm1836, %v1968
    %1976 = vst.msk [vmem:[%s1974 + $0x8] sm:$0xff] %vm1836, %v1971
    %v1978 = vsel %vm1836, %v1715, 0
    %1980 = vmatprep.subr.bf16.mxu0 0
    %1981 = vmatpush1.bf16.msra.mxu0 %v1835
    %1982 = vmatprep.subr.bf16.mxu0 0
    %1983 = vmatpush1.bf16.msra.mxu0 0
    %1984 = vmatprep.subr.bf16.mxu0 0
    %1985 = vmatpush1.bf16.msra.mxu0 0
    %1986 = vmatprep.subr.bf16.mxu0 0
    %1987 = vmatpush1.bf16.msra.mxu0 0
    %1988 = vmatprep.subr.bf16.mxu0 0
    %1989 = vmatpush1.bf16.msra.mxu0 0
    %1990 = vmatprep.subr.bf16.mxu0 0
    %1991 = vmatpush1.bf16.msra.mxu0 0
    %1992 = vmatprep.subr.bf16.mxu0 0
    %1993 = vmatpush1.bf16.msra.mxu0 0
    %1994 = vmatprep.subr.bf16.mxu0 0
    %1995 = vmatpush1.bf16.msra.mxu0 0
    %1996 = vmatprep.subr.bf16.mxu0 0
    %1997 = vmatpush1.bf16.msra.mxu0 0
    %1998 = vmatprep.subr.bf16.mxu0 0
    %1999 = vmatpush1.bf16.msra.mxu0 0
    %2000 = vmatprep.subr.bf16.mxu0 0
    %2001 = vmatpush1.bf16.msra.mxu0 0
    %2002 = vmatprep.subr.bf16.mxu0 0
    %2003 = vmatpush1.bf16.msra.mxu0 0
    %2004 = vmatprep.subr.bf16.mxu0 0
    %2005 = vmatpush1.bf16.msra.mxu0 0
    %2006 = vmatprep.subr.bf16.mxu0 0
    %2007 = vmatpush1.bf16.msra.mxu0 0
    %2008 = vmatprep.subr.bf16.mxu0 0
    %2009 = vmatpush1.bf16.msra.mxu0 0
    %2010 = vmatprep.subr.bf16.mxu0 0
    %2011 = vmatpush1.bf16.msra.mxu0 0
    %2012 = vmatprep.mubr.bf16.mxu0 0
    %2013 = vmatmul.mubr.bf16.gmra.mrb[0].mxu0 %v1978
    %v2014 = vpop.f32.mrb[0].mxu0
    %v2015 = vadd.f32 0.0, %v2014
    %v2016 = vpop.f32.mrb[0].mxu0
    %v2017 = vpop.f32.mrb[0].mxu0
    %v2018 = vadd.f32 0.0, %v2017
    %v2019 = vpop.f32.mrb[0].mxu0
    %2020 = vdwg.mxu0
    %s2021 = scalar_lea.vmem [#allocation2], 48
    %2022 = vst.msk [vmem:[%s2021] sm:$0xff] %vm1836, %v2015
    %2023 = vst.msk [vmem:[%s2021 + $0x8] sm:$0xff] %vm1836, %v2018
    // Predicated region
    $region102: #{tpu_custom_call.1} parent=1 // pred_check
      _
    $region103: #{tpu_custom_call.1} parent=1 // pred_check_branch
      %2025 = sbr.rel (0) target = $region105
    $region104: #{tpu_custom_call.1} parent=1 // pred_region
      %s2027 = ssub.s32 1024, 1024
      %2028 = vsyncadd [#allocation3], %s2027
      %s2029 = sshll.u32 [#allocation2], 4
      %s2030 = int_to_ptr.vmem [resolvable:$true] %s2029
      %2035 = dma.vmem_to_hbm [thread:$0]  %s2030, 1024, %s25, [#allocation3], 128, 128, 8
    $region105: #{tpu_custom_call.1} parent=1 // pred_fallthru
      _
    // Predicated region
    $region106: #{tpu_custom_call.1} parent=1 // pred_check
      _
    $region107: #{tpu_custom_call.1} parent=1 // pred_check_branch
      %2037 = sbr.rel (0) target = $region109
    $region108: #{tpu_custom_call.1} parent=1 // pred_region
      %2038 = dma.done [#allocation3], 1024
    $region109: #{tpu_custom_call.1} parent=1 // pred_fallthru
      _
    %2039 = vsyncpa [#allocation3], 1

</llo_original>
